<compile_context>
chip_gen: v5e
topology: v5e:2x2
jax: 0.10.0
libtpu: 0.0.40
codegen_flags: <defaults>
</compile_context>

<pallas_src>
import jax
import jax.numpy as jnp
from jax import lax
from jax.experimental import pallas as pl
from jax.experimental.pallas import tpu as pltpu


# ----------------------------------------------------------------------------
# Fused kernel: all layers + final product for one block of Bt batch rows.
# ----------------------------------------------------------------------------
def make_fused_kernel(num_layers, num_heads, head_dim, dim, seq_len,
                      batch_block, compute_dtype, eps=1e-5):
    H, hd, D, N, Bt = num_heads, head_dim, dim, seq_len, batch_block
    approx_recip = compute_dtype != jnp.float32  # exact recip on the f32 path

    def kernel(e1_ref, e2_ref, wqkv_ref, wout_ref, bqkv_ref, vec_ref,
               out_ref, e1_state, e2_state, attn_buf):
        layer = pl.program_id(1)

        # Load both residual streams into f32 VMEM scratch at the first layer;
        # they stay resident for all subsequent layers of this batch block.
        @pl.when(layer == 0)
        def _():
            e1_state[...] = e1_ref[...].reshape(Bt * N, D).astype(jnp.float32)
            e2_state[...] = e2_ref[...].reshape(Bt * N, D).astype(jnp.float32)

        x1 = e1_state[...]                       # (Bt*N, D) f32 residual
        x2 = e2_state[...]
        x1c = x1.astype(compute_dtype)           # MXU operands (bf16 fast path)
        x2c = x2.astype(compute_dtype)

        wqkv = wqkv_ref[0]                       # (D, 3D) compute dtype, q cols pre-scaled
        wout = wout_ref[0]                       # (D, D)  compute dtype
        bqkv = bqkv_ref[0]                       # (1, 3D) f32, q part pre-scaled
        ln_v = vec_ref[0]                        # (3, D)  f32: b_out, gamma, beta
        b_out, gamma, beta = ln_v[0:1], ln_v[1:2], ln_v[2:3]

        # One lane-dense QKV projection per stream (f32 accumulation on MXU).
        qkv1 = jnp.dot(x1c, wqkv, preferred_element_type=jnp.float32) + bqkv
        qkv2 = jnp.dot(x2c, wqkv, preferred_element_type=jnp.float32) + bqkv

        def attention(qkv_q, qkv_kv):
            """softmax(q k^T) v per batch row & head (q from `qkv_q`, k/v from
            `qkv_kv`), assembled into attn_buf, then ONE (Bt*N,D)x(D,D) dot."""
            # TODO(synk): for large H convert the static head loop into
            # lax.fori_loop(..., unroll=2) to bound per-head vreg live ranges.
            for b in range(Bt):                              # block-diagonal per row
                rows = slice(b * N, (b + 1) * N)
                for h in range(H):                           # static, unrolled
                    qcols = slice(h * hd, (h + 1) * hd)
                    kcols = slice(D + h * hd, D + (h + 1) * hd)
                    vcols = slice(2 * D + h * hd, 2 * D + (h + 1) * hd)
                    q = qkv_q[rows, qcols].astype(compute_dtype)
                    k = qkv_kv[rows, kcols].astype(compute_dtype)
                    v = qkv_kv[rows, vcols].astype(compute_dtype)
                    # scores: contract last dims directly (no transposed K copy);
                    # the softmax scale is already folded into the q weights.
                    s = lax.dot_general(
                        q, k, dimension_numbers=(((1,), (1,)), ((), ())),
                        preferred_element_type=jnp.float32)          # (N, N)
                    s = s - jnp.max(s, axis=-1, keepdims=True)
                    p = jnp.exp(s)
                    denom = jnp.sum(p, axis=-1, keepdims=True)        # (N, 1)
                    o = jnp.dot(p.astype(compute_dtype), v,
                                preferred_element_type=jnp.float32)   # (N, hd)
                    # normalize AFTER p@v: N*hd EUP-recip multiplies, not N*N divs
                    o = o * pl.reciprocal(denom, approx=approx_recip)
                    attn_buf[rows, qcols] = o
            # one lane-dense out-projection across all heads (contraction = D)
            return jnp.dot(attn_buf[...].astype(compute_dtype), wout,
                           preferred_element_type=jnp.float32)        # (Bt*N, D)

        def residual_layernorm(x, attn):
            y = x + attn + b_out
            mu = jnp.mean(y, axis=-1, keepdims=True)
            var = jnp.mean(jnp.square(y - mu), axis=-1, keepdims=True)
            return (y - mu) * lax.rsqrt(var + eps) * gamma + beta

        y1 = residual_layernorm(x1, attention(qkv1, qkv2))   # q1 with k2/v2
        y2 = residual_layernorm(x2, attention(qkv2, qkv1))   # q2 with k1/v1

        e1_state[...] = y1
        e2_state[...] = y2

        @pl.when(layer == num_layers - 1)
        def _():
            out_ref[...] = (y1 * y2).reshape(Bt, N, D).astype(out_ref.dtype)

    return kernel


# ----------------------------------------------------------------------------
# Wrapper: host-side weight repacking + one pallas_call for the whole model.
# Weights use the x @ W (+ b) convention, i.e. W is PyTorch's weight.T.
# ----------------------------------------------------------------------------
def _pick_batch_block(B, N, D):
    divisors = [d for d in range(1, B + 1) if B % d == 0]
    # Keep >= 2 batch blocks when possible so both v7x TensorCores get work.
    preferred = [d for d in divisors if B // d >= 2] or [B]
    # Cap so the three (Bt*N, D) f32 scratch buffers stay well inside VMEM.
    cap = max(1, (8 * 1024 * 1024) // max(1, 3 * N * D * 4))
    ok = [d for d in preferred if d <= cap]
    return max(ok) if ok else 1


def multi_layer_cross_attention(embedding1, embedding2, layer_params, num_heads,
                                compute_dtype=jnp.bfloat16, batch_block=None):
    B, N, D = embedding1.shape
    L = len(layer_params)
    H = num_heads
    hd = D // H
    assert hd * H == D, "dim must be divisible by num_heads"
    scale = float(hd) ** -0.5

    if batch_block is None:
        batch_block = _pick_batch_block(B, N, D)
    assert B % batch_block == 0, "batch_block must divide batch"
    Bt = batch_block

    # One-time repack: fold the softmax scale into the q columns / q bias.
    # Column order of (D, 3D) is already [q heads | k heads | v heads].
    wqkv_l, bqkv_l, wout_l, vec_l = [], [], [], []
    for (wqkv, bqkv, wout, bout, gamma, beta) in layer_params:
        wqkv_s = jnp.concatenate([wqkv[:, :D] * scale, wqkv[:, D:]], axis=1)
        bqkv_s = jnp.concatenate([bqkv[:D] * scale, bqkv[D:]])
        wqkv_l.append(wqkv_s)                                  # (D, 3D)
        bqkv_l.append(bqkv_s.reshape(1, 3 * D))                # (1, 3D)
        wout_l.append(wout)                                    # (D, D)
        vec_l.append(jnp.stack([bout, gamma, beta], axis=0))   # (3, D)

    w_qkv = jnp.stack(wqkv_l).astype(compute_dtype)   # (L, D, 3D)
    w_out = jnp.stack(wout_l).astype(compute_dtype)   # (L, D, D)
    b_qkv = jnp.stack(bqkv_l).astype(jnp.float32)     # (L, 1, 3D)
    ln_vec = jnp.stack(vec_l).astype(jnp.float32)     # (L, 3, D)

    kernel = make_fused_kernel(L, H, hd, D, N, Bt, compute_dtype)

    emb_spec = pl.BlockSpec((Bt, N, D), lambda b, l: (b, 0, 0))

    # Simple per-step VMEM footprint estimate -> explicit scoped limit
    # (clamped to [32 MiB, 64 MiB] so it is safe on v7x as well).
    itemsize_c = jnp.dtype(compute_dtype).itemsize
    itemsize_in = jnp.dtype(embedding1.dtype).itemsize
    est = (3 * Bt * N * D * 4                     # f32 scratch (2 streams + attn buf)
           + 2 * 2 * Bt * N * D * itemsize_in     # double-buffered embedding tiles
           + 2 * (D * 3 * D + D * D) * itemsize_c # double-buffered weights
           + 2 * Bt * N * 3 * D * 4               # qkv activations (f32)
           + N * N * 4 + 4 * Bt * N * D * 4)      # score tile + f32 temporaries
    vmem_limit = int(min(max(2 * est, 32 * 1024 * 1024), 64 * 1024 * 1024))

    return pl.pallas_call(
        kernel,
        out_shape=jax.ShapeDtypeStruct((B, N, D), embedding1.dtype),
        grid=(B // Bt, L),                                   # layers innermost
        in_specs=[
            emb_spec,                                                  # embedding1
            emb_spec,                                                  # embedding2
            pl.BlockSpec((1, D, 3 * D), lambda b, l: (l, 0, 0)),       # w_qkv
            pl.BlockSpec((1, D, D), lambda b, l: (l, 0, 0)),           # w_out
            pl.BlockSpec((1, 1, 3 * D), lambda b, l: (l, 0, 0)),       # b_qkv
            pl.BlockSpec((1, 3, D), lambda b, l: (l, 0, 0)),           # b_out/γ/β
        ],
        out_specs=pl.BlockSpec((Bt, N, D), lambda b, l: (b, 0, 0)),
        scratch_shapes=[
            pltpu.VMEM((Bt * N, D), jnp.float32),        # residual stream 1
            pltpu.VMEM((Bt * N, D), jnp.float32),        # residual stream 2
            pltpu.VMEM((Bt * N, D), jnp.float32),        # per-head attn assembly
        ],
        compiler_params=pltpu.CompilerParams(
            dimension_semantics=("parallel", "arbitrary"),
            vmem_limit_bytes=vmem_limit),
    )(embedding1, embedding2, w_qkv, w_out, b_qkv, ln_vec)


# ----------------------------------------------------------------------------
# Pure-JAX reference (correctness check only).
# ----------------------------------------------------------------------------
def _layer_ref(e1, e2, params, num_heads):
    wqkv, bqkv, wout, bout, gamma, beta = params
    B, N, D = e1.shape
    hd = D // num_heads
    scale = hd ** (-0.5)

    def qkv_split(e):
        qkv = e @ wqkv + bqkv
        qkv = qkv.reshape(B, N, 3, num_heads, hd)
        return qkv[:, :, 0], qkv[:, :, 1], qkv[:, :, 2]

    q1, k1, v1 = qkv_split(e1)
    q2, k2, v2 = qkv_split(e2)

    def attend(q, k, v):
        w = jnp.einsum('bnhd,bshd->bhns', q, k) * scale
        w = jax.nn.softmax(w, axis=-1)
        return jnp.einsum('bhns,bshd->bnhd', w, v).reshape(B, N, D)

    def ln(y):
        mu = jnp.mean(y, axis=-1, keepdims=True)
        var = jnp.mean((y - mu) ** 2, axis=-1, keepdims=True)
        return (y - mu) * jax.lax.rsqrt(var + 1e-5) * gamma + beta

    o1 = ln(e1 + attend(q1, k2, v2) @ wout + bout)
    o2 = ln(e2 + attend(q2, k1, v1) @ wout + bout)
    return o1, o2


def _model_ref(e1, e2, layer_params, num_heads):
    for params in layer_params:
        e1, e2 = _layer_ref(e1, e2, params, num_heads)
    return e1 * e2


# ----------------------------------------------------------------------------
# Deterministic synthetic parameters (shapes match the PyTorch module).
# ----------------------------------------------------------------------------
def init_layer_params(key, dim):
    k1, k2, k3, k4 = jax.random.split(key, 4)
    wqkv = jax.random.normal(k1, (dim, 3 * dim), jnp.float32) * 0.1
    bqkv = jax.random.normal(k2, (3 * dim,), jnp.float32) * 0.01
    wout = jax.random.normal(k3, (dim, dim), jnp.float32) * 0.1
    bout = jax.random.normal(k4, (dim,), jnp.float32) * 0.01
    gamma = jnp.ones((dim,), jnp.float32)   # nn.LayerNorm default init
    beta = jnp.zeros((dim,), jnp.float32)
    return (wqkv, bqkv, wout, bout, gamma, beta)


if __name__ == "__main__":
    B, N, DIM, HEADS, LAYERS = 2, 8, 32, 4, 3

    key = jax.random.PRNGKey(0)
    k_e1, k_e2, k_p = jax.random.split(key, 3)
    emb1 = jax.random.normal(k_e1, (B, N, DIM), jnp.float32)
    emb2 = jax.random.normal(k_e2, (B, N, DIM), jnp.float32)

    layer_keys = jax.random.split(k_p, LAYERS)
    layer_params = [init_layer_params(k, DIM) for k in layer_keys]

    ref = _model_ref(emb1, emb2, layer_params, HEADS)

    # f32 compute path: exact module semantics (tight tolerance).
    out_f32 = multi_layer_cross_attention(emb1, emb2, layer_params, HEADS,
                                          compute_dtype=jnp.float32)
    out_f32 = jax.block_until_ready(out_f32)
    assert out_f32.shape == (B, N, DIM)
    assert jnp.allclose(out_f32, ref, atol=1e-3, rtol=1e-3), "f32 mismatch vs reference"

    # bf16 MXU operand path (the fast path on v5e/v6e/v7x); bf16-level tolerance.
    out_bf16 = multi_layer_cross_attention(emb1, emb2, layer_params, HEADS,
                                           compute_dtype=jnp.bfloat16)
    out_bf16 = jax.block_until_ready(out_bf16)
    assert out_bf16.shape == (B, N, DIM)
    assert jnp.allclose(out_bf16, ref, atol=1e-1, rtol=1e-1), "bf16 mismatch vs reference"

    print("KERNEL_OK")
</pallas_src>

<mosaic_0001>
module attributes {stable_mosaic.version = 11 : i64} {
  func.func @kernel(%arg0: i32, %arg1: i32, %arg2: memref<1x8x32xf32, #tpu.memory_space<vmem>>, %arg3: memref<1x8x32xf32, #tpu.memory_space<vmem>>, %arg4: memref<1x32x96xf32, #tpu.memory_space<vmem>>, %arg5: memref<1x32x32xf32, #tpu.memory_space<vmem>>, %arg6: memref<1x1x96xf32, #tpu.memory_space<vmem>>, %arg7: memref<1x3x32xf32, #tpu.memory_space<vmem>>, %arg8: memref<1x8x32xf32, #tpu.memory_space<vmem>>, %arg9: memref<8x32xf32, #tpu.memory_space<vmem>>, %arg10: memref<8x32xf32, #tpu.memory_space<vmem>>, %arg11: memref<8x32xf32, #tpu.memory_space<vmem>>) attributes {dimension_semantics = [#tpu.dimension_semantics<parallel>, #tpu.dimension_semantics<arbitrary>], iteration_bounds = array<i64: 2, 3>, scalar_prefetch = 0 : i64, scratch_operands = 3 : i64, tpu.core_type = #tpu.core_type<tc>, window_params = [{transform_indices = @transform_0, window_bounds = array<i64: 1, 8, 32>}, {transform_indices = @transform_1, window_bounds = array<i64: 1, 8, 32>}, {transform_indices = @transform_2, window_bounds = array<i64: 1, 32, 96>}, {transform_indices = @transform_3, window_bounds = array<i64: 1, 32, 32>}, {transform_indices = @transform_4, window_bounds = array<i64: 1, 1, 96>}, {transform_indices = @transform_5, window_bounds = array<i64: 1, 3, 32>}, {transform_indices = @transform_6, window_bounds = array<i64: 1, 8, 32>}]} {
    %c0_i32 = arith.constant 0 : i32
    %0 = arith.cmpi eq, %arg1, %c0_i32 : i32
    %1 = arith.extui %0 : i1 to i32
    %c0_i32_0 = arith.constant 0 : i32
    %2 = arith.cmpi ne, %1, %c0_i32_0 : i32
    scf.if %2 {
      %c0_83 = arith.constant 0 : index
      %c0_84 = arith.constant 0 : index
      %c0_85 = arith.constant 0 : index
      %209 = vector.load %arg2[%c0_83, %c0_84, %c0_85] : memref<1x8x32xf32, #tpu.memory_space<vmem>>, vector<1x8x32xf32>
      %210 = vector.shape_cast %209 : vector<1x8x32xf32> to vector<8x32xf32>
      %c0_86 = arith.constant 0 : index
      %c0_87 = arith.constant 0 : index
      %211 = vector.load %arg9[%c0_86, %c0_87] : memref<8x32xf32, #tpu.memory_space<vmem>>, vector<8x32xf32>
      tpu.vector_store %arg9[%c0_86, %c0_87], %210 {strides = array<i32>} : memref<8x32xf32, #tpu.memory_space<vmem>>, vector<8x32xf32>,
      %c0_88 = arith.constant 0 : index
      %c0_89 = arith.constant 0 : index
      %c0_90 = arith.constant 0 : index
      %212 = vector.load %arg3[%c0_88, %c0_89, %c0_90] : memref<1x8x32xf32, #tpu.memory_space<vmem>>, vector<1x8x32xf32>
      %213 = vector.shape_cast %212 : vector<1x8x32xf32> to vector<8x32xf32>
      %c0_91 = arith.constant 0 : index
      %c0_92 = arith.constant 0 : index
      %214 = vector.load %arg10[%c0_91, %c0_92] : memref<8x32xf32, #tpu.memory_space<vmem>>, vector<8x32xf32>
      tpu.vector_store %arg10[%c0_91, %c0_92], %213 {strides = array<i32>} : memref<8x32xf32, #tpu.memory_space<vmem>>, vector<8x32xf32>,
    } else {
    }
    %c0 = arith.constant 0 : index
    %c0_1 = arith.constant 0 : index
    %3 = vector.load %arg9[%c0, %c0_1] : memref<8x32xf32, #tpu.memory_space<vmem>>, vector<8x32xf32>
    %c0_2 = arith.constant 0 : index
    %c0_3 = arith.constant 0 : index
    %4 = vector.load %arg10[%c0_2, %c0_3] : memref<8x32xf32, #tpu.memory_space<vmem>>, vector<8x32xf32>
    %c0_4 = arith.constant 0 : index
    %c0_5 = arith.constant 0 : index
    %c0_6 = arith.constant 0 : index
    %5 = vector.load %arg4[%c0_4, %c0_5, %c0_6] : memref<1x32x96xf32, #tpu.memory_space<vmem>>, vector<1x32x96xf32>
    %6 = vector.shape_cast %5 : vector<1x32x96xf32> to vector<32x96xf32>
    %c0_7 = arith.constant 0 : index
    %c0_8 = arith.constant 0 : index
    %c0_9 = arith.constant 0 : index
    %7 = vector.load %arg5[%c0_7, %c0_8, %c0_9] : memref<1x32x32xf32, #tpu.memory_space<vmem>>, vector<1x32x32xf32>
    %8 = vector.shape_cast %7 : vector<1x32x32xf32> to vector<32x32xf32>
    %c0_10 = arith.constant 0 : index
    %c0_11 = arith.constant 0 : index
    %c0_12 = arith.constant 0 : index
    %9 = vector.load %arg6[%c0_10, %c0_11, %c0_12] : memref<1x1x96xf32, #tpu.memory_space<vmem>>, vector<1x1x96xf32>
    %10 = vector.shape_cast %9 : vector<1x1x96xf32> to vector<1x96xf32>
    %c0_13 = arith.constant 0 : index
    %c0_14 = arith.constant 0 : index
    %c0_15 = arith.constant 0 : index
    %11 = vector.load %arg7[%c0_13, %c0_14, %c0_15] : memref<1x3x32xf32, #tpu.memory_space<vmem>>, vector<1x3x32xf32>
    %12 = vector.shape_cast %11 : vector<1x3x32xf32> to vector<3x32xf32>
    %13 = vector.extract_strided_slice %12 {offsets = [0, 0], sizes = [1, 32], strides = [1, 1]} : vector<3x32xf32> to vector<1x32xf32>
    %14 = vector.extract_strided_slice %12 {offsets = [1, 0], sizes = [1, 32], strides = [1, 1]} : vector<3x32xf32> to vector<1x32xf32>
    %15 = vector.extract_strided_slice %12 {offsets = [2, 0], sizes = [1, 32], strides = [1, 1]} : vector<3x32xf32> to vector<1x32xf32>
    %cst = arith.constant dense<0.000000e+00> : vector<8x96xf32>
    %16 = tpu.matmul %3, %6, %cst {dimension_numbers = #tpu.dot_dimension_numbers<[1], [0], [0], [1], [0, 0, 1, 1], [], []>} : vector<8x32xf32>, vector<32x96xf32>, vector<8x96xf32> -> vector<8x96xf32>
    %17 = vector.broadcast %10 : vector<1x96xf32> to vector<8x96xf32>
    %18 = arith.addf %16, %17 : vector<8x96xf32>
    %cst_16 = arith.constant dense<0.000000e+00> : vector<8x96xf32>
    %19 = tpu.matmul %4, %6, %cst_16 {dimension_numbers = #tpu.dot_dimension_numbers<[1], [0], [0], [1], [0, 0, 1, 1], [], []>} : vector<8x32xf32>, vector<32x96xf32>, vector<8x96xf32> -> vector<8x96xf32>
    %20 = vector.broadcast %10 : vector<1x96xf32> to vector<8x96xf32>
    %21 = arith.addf %19, %20 : vector<8x96xf32>
    %22 = vector.extract_strided_slice %18 {offsets = [0, 0], sizes = [8, 8], strides = [1, 1]} : vector<8x96xf32> to vector<8x8xf32>
    %23 = vector.extract_strided_slice %21 {offsets = [0, 32], sizes = [8, 8], strides = [1, 1]} : vector<8x96xf32> to vector<8x8xf32>
    %24 = vector.extract_strided_slice %21 {offsets = [0, 64], sizes = [8, 8], strides = [1, 1]} : vector<8x96xf32> to vector<8x8xf32>
    %cst_17 = arith.constant dense<0.000000e+00> : vector<8x8xf32>
    %25 = tpu.matmul %22, %23, %cst_17 {dimension_numbers = #tpu.dot_dimension_numbers<[1], [1], [0], [0], [0, 0, 1, 0], [], []>} : vector<8x8xf32>, vector<8x8xf32>, vector<8x8xf32> -> vector<8x8xf32>
    %cst_18 = arith.constant dense<0xFF800000> : vector<8xf32>
    %26 = vector.multi_reduction <maximumf>, %25, %cst_18 [1] : vector<8x8xf32> to vector<8xf32>
    %27 = vector.shape_cast %26 : vector<8xf32> to vector<8x1xf32>
    %28 = vector.broadcast %27 : vector<8x1xf32> to vector<8x8xf32>
    %29 = arith.subf %25, %28 : vector<8x8xf32>
    %30 = math.exp %29 : vector<8x8xf32>
    %cst_19 = arith.constant dense<0.000000e+00> : vector<8xf32>
    %31 = vector.multi_reduction <add>, %30, %cst_19 [1] : vector<8x8xf32> to vector<8xf32>
    %32 = vector.shape_cast %31 : vector<8xf32> to vector<8x1xf32>
    %cst_20 = arith.constant dense<0.000000e+00> : vector<8x8xf32>
    %33 = tpu.matmul %30, %24, %cst_20 {dimension_numbers = #tpu.dot_dimension_numbers<[1], [0], [0], [1], [0, 0, 1, 1], [], []>} : vector<8x8xf32>, vector<8x8xf32>, vector<8x8xf32> -> vector<8x8xf32>
    %34 = tpu.reciprocal %32 : vector<8x1xf32> -> vector<8x1xf32>
    %35 = vector.broadcast %34 : vector<8x1xf32> to vector<8x8xf32>
    %36 = arith.mulf %33, %35 : vector<8x8xf32>
    %c0_21 = arith.constant 0 : index
    %c0_22 = arith.constant 0 : index
    %37 = vector.load %arg11[%c0_21, %c0_22] : memref<8x32xf32, #tpu.memory_space<vmem>>, vector<8x8xf32>
    tpu.vector_store %arg11[%c0_21, %c0_22], %36 {strides = array<i32>} : memref<8x32xf32, #tpu.memory_space<vmem>>, vector<8x8xf32>,
    %38 = vector.extract_strided_slice %18 {offsets = [0, 8], sizes = [8, 8], strides = [1, 1]} : vector<8x96xf32> to vector<8x8xf32>
    %39 = vector.extract_strided_slice %21 {offsets = [0, 40], sizes = [8, 8], strides = [1, 1]} : vector<8x96xf32> to vector<8x8xf32>
    %40 = vector.extract_strided_slice %21 {offsets = [0, 72], sizes = [8, 8], strides = [1, 1]} : vector<8x96xf32> to vector<8x8xf32>
    %cst_23 = arith.constant dense<0.000000e+00> : vector<8x8xf32>
    %41 = tpu.matmul %38, %39, %cst_23 {dimension_numbers = #tpu.dot_dimension_numbers<[1], [1], [0], [0], [0, 0, 1, 0], [], []>} : vector<8x8xf32>, vector<8x8xf32>, vector<8x8xf32> -> vector<8x8xf32>
    %cst_24 = arith.constant dense<0xFF800000> : vector<8xf32>
    %42 = vector.multi_reduction <maximumf>, %41, %cst_24 [1] : vector<8x8xf32> to vector<8xf32>
    %43 = vector.shape_cast %42 : vector<8xf32> to vector<8x1xf32>
    %44 = vector.broadcast %43 : vector<8x1xf32> to vector<8x8xf32>
    %45 = arith.subf %41, %44 : vector<8x8xf32>
    %46 = math.exp %45 : vector<8x8xf32>
    %cst_25 = arith.constant dense<0.000000e+00> : vector<8xf32>
    %47 = vector.multi_reduction <add>, %46, %cst_25 [1] : vector<8x8xf32> to vector<8xf32>
    %48 = vector.shape_cast %47 : vector<8xf32> to vector<8x1xf32>
    %cst_26 = arith.constant dense<0.000000e+00> : vector<8x8xf32>
    %49 = tpu.matmul %46, %40, %cst_26 {dimension_numbers = #tpu.dot_dimension_numbers<[1], [0], [0], [1], [0, 0, 1, 1], [], []>} : vector<8x8xf32>, vector<8x8xf32>, vector<8x8xf32> -> vector<8x8xf32>
    %50 = tpu.reciprocal %48 : vector<8x1xf32> -> vector<8x1xf32>
    %51 = vector.broadcast %50 : vector<8x1xf32> to vector<8x8xf32>
    %52 = arith.mulf %49, %51 : vector<8x8xf32>
    %c0_27 = arith.constant 0 : index
    %c8 = arith.constant 8 : index
    %53 = vector.load %arg11[%c0_27, %c8] : memref<8x32xf32, #tpu.memory_space<vmem>>, vector<8x8xf32>
    tpu.vector_store %arg11[%c0_27, %c8], %52 {strides = array<i32>} : memref<8x32xf32, #tpu.memory_space<vmem>>, vector<8x8xf32>,
    %54 = vector.extract_strided_slice %18 {offsets = [0, 16], sizes = [8, 8], strides = [1, 1]} : vector<8x96xf32> to vector<8x8xf32>
    %55 = vector.extract_strided_slice %21 {offsets = [0, 48], sizes = [8, 8], strides = [1, 1]} : vector<8x96xf32> to vector<8x8xf32>
    %56 = vector.extract_strided_slice %21 {offsets = [0, 80], sizes = [8, 8], strides = [1, 1]} : vector<8x96xf32> to vector<8x8xf32>
    %cst_28 = arith.constant dense<0.000000e+00> : vector<8x8xf32>
    %57 = tpu.matmul %54, %55, %cst_28 {dimension_numbers = #tpu.dot_dimension_numbers<[1], [1], [0], [0], [0, 0, 1, 0], [], []>} : vector<8x8xf32>, vector<8x8xf32>, vector<8x8xf32> -> vector<8x8xf32>
    %cst_29 = arith.constant dense<0xFF800000> : vector<8xf32>
    %58 = vector.multi_reduction <maximumf>, %57, %cst_29 [1] : vector<8x8xf32> to vector<8xf32>
    %59 = vector.shape_cast %58 : vector<8xf32> to vector<8x1xf32>
    %60 = vector.broadcast %59 : vector<8x1xf32> to vector<8x8xf32>
    %61 = arith.subf %57, %60 : vector<8x8xf32>
    %62 = math.exp %61 : vector<8x8xf32>
    %cst_30 = arith.constant dense<0.000000e+00> : vector<8xf32>
    %63 = vector.multi_reduction <add>, %62, %cst_30 [1] : vector<8x8xf32> to vector<8xf32>
    %64 = vector.shape_cast %63 : vector<8xf32> to vector<8x1xf32>
    %cst_31 = arith.constant dense<0.000000e+00> : vector<8x8xf32>
    %65 = tpu.matmul %62, %56, %cst_31 {dimension_numbers = #tpu.dot_dimension_numbers<[1], [0], [0], [1], [0, 0, 1, 1], [], []>} : vector<8x8xf32>, vector<8x8xf32>, vector<8x8xf32> -> vector<8x8xf32>
    %66 = tpu.reciprocal %64 : vector<8x1xf32> -> vector<8x1xf32>
    %67 = vector.broadcast %66 : vector<8x1xf32> to vector<8x8xf32>
    %68 = arith.mulf %65, %67 : vector<8x8xf32>
    %c0_32 = arith.constant 0 : index
    %c16 = arith.constant 16 : index
    %69 = vector.load %arg11[%c0_32, %c16] : memref<8x32xf32, #tpu.memory_space<vmem>>, vector<8x8xf32>
    tpu.vector_store %arg11[%c0_32, %c16], %68 {strides = array<i32>} : memref<8x32xf32, #tpu.memory_space<vmem>>, vector<8x8xf32>,
    %70 = vector.extract_strided_slice %18 {offsets = [0, 24], sizes = [8, 8], strides = [1, 1]} : vector<8x96xf32> to vector<8x8xf32>
    %71 = vector.extract_strided_slice %21 {offsets = [0, 56], sizes = [8, 8], strides = [1, 1]} : vector<8x96xf32> to vector<8x8xf32>
    %72 = vector.extract_strided_slice %21 {offsets = [0, 88], sizes = [8, 8], strides = [1, 1]} : vector<8x96xf32> to vector<8x8xf32>
    %cst_33 = arith.constant dense<0.000000e+00> : vector<8x8xf32>
    %73 = tpu.matmul %70, %71, %cst_33 {dimension_numbers = #tpu.dot_dimension_numbers<[1], [1], [0], [0], [0, 0, 1, 0], [], []>} : vector<8x8xf32>, vector<8x8xf32>, vector<8x8xf32> -> vector<8x8xf32>
    %cst_34 = arith.constant dense<0xFF800000> : vector<8xf32>
    %74 = vector.multi_reduction <maximumf>, %73, %cst_34 [1] : vector<8x8xf32> to vector<8xf32>
    %75 = vector.shape_cast %74 : vector<8xf32> to vector<8x1xf32>
    %76 = vector.broadcast %75 : vector<8x1xf32> to vector<8x8xf32>
    %77 = arith.subf %73, %76 : vector<8x8xf32>
    %78 = math.exp %77 : vector<8x8xf32>
    %cst_35 = arith.constant dense<0.000000e+00> : vector<8xf32>
    %79 = vector.multi_reduction <add>, %78, %cst_35 [1] : vector<8x8xf32> to vector<8xf32>
    %80 = vector.shape_cast %79 : vector<8xf32> to vector<8x1xf32>
    %cst_36 = arith.constant dense<0.000000e+00> : vector<8x8xf32>
    %81 = tpu.matmul %78, %72, %cst_36 {dimension_numbers = #tpu.dot_dimension_numbers<[1], [0], [0], [1], [0, 0, 1, 1], [], []>} : vector<8x8xf32>, vector<8x8xf32>, vector<8x8xf32> -> vector<8x8xf32>
    %82 = tpu.reciprocal %80 : vector<8x1xf32> -> vector<8x1xf32>
    %83 = vector.broadcast %82 : vector<8x1xf32> to vector<8x8xf32>
    %84 = arith.mulf %81, %83 : vector<8x8xf32>
    %c0_37 = arith.constant 0 : index
    %c24 = arith.constant 24 : index
    %85 = vector.load %arg11[%c0_37, %c24] : memref<8x32xf32, #tpu.memory_space<vmem>>, vector<8x8xf32>
    tpu.vector_store %arg11[%c0_37, %c24], %84 {strides = array<i32>} : memref<8x32xf32, #tpu.memory_space<vmem>>, vector<8x8xf32>,
    %c0_38 = arith.constant 0 : index
    %c0_39 = arith.constant 0 : index
    %86 = vector.load %arg11[%c0_38, %c0_39] : memref<8x32xf32, #tpu.memory_space<vmem>>, vector<8x32xf32>
    %cst_40 = arith.constant dense<0.000000e+00> : vector<8x32xf32>
    %87 = tpu.matmul %86, %8, %cst_40 {dimension_numbers = #tpu.dot_dimension_numbers<[1], [0], [0], [1], [0, 0, 1, 1], [], []>} : vector<8x32xf32>, vector<32x32xf32>, vector<8x32xf32> -> vector<8x32xf32>
    %88 = arith.addf %3, %87 : vector<8x32xf32>
    %89 = vector.broadcast %13 : vector<1x32xf32> to vector<8x32xf32>
    %90 = arith.addf %88, %89 : vector<8x32xf32>
    %cst_41 = arith.constant dense<0.000000e+00> : vector<8xf32>
    %91 = vector.multi_reduction <add>, %90, %cst_41 [1] : vector<8x32xf32> to vector<8xf32>
    %92 = vector.shape_cast %91 : vector<8xf32> to vector<8x1xf32>
    %cst_42 = arith.constant 3.200000e+01 : f32
    %93 = vector.broadcast %cst_42 : f32 to vector<8x1xf32>
    %94 = arith.divf %92, %93 : vector<8x1xf32>
    %95 = vector.broadcast %94 : vector<8x1xf32> to vector<8x32xf32>
    %96 = arith.subf %90, %95 : vector<8x32xf32>
    %97 = arith.mulf %96, %96 : vector<8x32xf32>
    %cst_43 = arith.constant dense<0.000000e+00> : vector<8xf32>
    %98 = vector.multi_reduction <add>, %97, %cst_43 [1] : vector<8x32xf32> to vector<8xf32>
    %99 = vector.shape_cast %98 : vector<8xf32> to vector<8x1xf32>
    %cst_44 = arith.constant 3.200000e+01 : f32
    %100 = vector.broadcast %cst_44 : f32 to vector<8x1xf32>
    %101 = arith.divf %99, %100 : vector<8x1xf32>
    %102 = vector.broadcast %94 : vector<8x1xf32> to vector<8x32xf32>
    %103 = arith.subf %90, %102 : vector<8x32xf32>
    %cst_45 = arith.constant 9.99999974E-6 : f32
    %104 = vector.broadcast %cst_45 : f32 to vector<8x1xf32>
    %105 = arith.addf %101, %104 : vector<8x1xf32>
    %106 = math.rsqrt %105 : vector<8x1xf32>
    %107 = vector.broadcast %106 : vector<8x1xf32> to vector<8x32xf32>
    %108 = arith.mulf %103, %107 : vector<8x32xf32>
    %109 = vector.broadcast %14 : vector<1x32xf32> to vector<8x32xf32>
    %110 = arith.mulf %108, %109 : vector<8x32xf32>
    %111 = vector.broadcast %15 : vector<1x32xf32> to vector<8x32xf32>
    %112 = arith.addf %110, %111 : vector<8x32xf32>
    %113 = vector.extract_strided_slice %21 {offsets = [0, 0], sizes = [8, 8], strides = [1, 1]} : vector<8x96xf32> to vector<8x8xf32>
    %114 = vector.extract_strided_slice %18 {offsets = [0, 32], sizes = [8, 8], strides = [1, 1]} : vector<8x96xf32> to vector<8x8xf32>
    %115 = vector.extract_strided_slice %18 {offsets = [0, 64], sizes = [8, 8], strides = [1, 1]} : vector<8x96xf32> to vector<8x8xf32>
    %cst_46 = arith.constant dense<0.000000e+00> : vector<8x8xf32>
    %116 = tpu.matmul %113, %114, %cst_46 {dimension_numbers = #tpu.dot_dimension_numbers<[1], [1], [0], [0], [0, 0, 1, 0], [], []>} : vector<8x8xf32>, vector<8x8xf32>, vector<8x8xf32> -> vector<8x8xf32>
    %cst_47 = arith.constant dense<0xFF800000> : vector<8xf32>
    %117 = vector.multi_reduction <maximumf>, %116, %cst_47 [1] : vector<8x8xf32> to vector<8xf32>
    %118 = vector.shape_cast %117 : vector<8xf32> to vector<8x1xf32>
    %119 = vector.broadcast %118 : vector<8x1xf32> to vector<8x8xf32>
    %120 = arith.subf %116, %119 : vector<8x8xf32>
    %121 = math.exp %120 : vector<8x8xf32>
    %cst_48 = arith.constant dense<0.000000e+00> : vector<8xf32>
    %122 = vector.multi_reduction <add>, %121, %cst_48 [1] : vector<8x8xf32> to vector<8xf32>
    %123 = vector.shape_cast %122 : vector<8xf32> to vector<8x1xf32>
    %cst_49 = arith.constant dense<0.000000e+00> : vector<8x8xf32>
    %124 = tpu.matmul %121, %115, %cst_49 {dimension_numbers = #tpu.dot_dimension_numbers<[1], [0], [0], [1], [0, 0, 1, 1], [], []>} : vector<8x8xf32>, vector<8x8xf32>, vector<8x8xf32> -> vector<8x8xf32>
    %125 = tpu.reciprocal %123 : vector<8x1xf32> -> vector<8x1xf32>
    %126 = vector.broadcast %125 : vector<8x1xf32> to vector<8x8xf32>
    %127 = arith.mulf %124, %126 : vector<8x8xf32>
    %c0_50 = arith.constant 0 : index
    %c0_51 = arith.constant 0 : index
    %128 = vector.load %arg11[%c0_50, %c0_51] : memref<8x32xf32, #tpu.memory_space<vmem>>, vector<8x8xf32>
    tpu.vector_store %arg11[%c0_50, %c0_51], %127 {strides = array<i32>} : memref<8x32xf32, #tpu.memory_space<vmem>>, vector<8x8xf32>,
    %129 = vector.extract_strided_slice %21 {offsets = [0, 8], sizes = [8, 8], strides = [1, 1]} : vector<8x96xf32> to vector<8x8xf32>
    %130 = vector.extract_strided_slice %18 {offsets = [0, 40], sizes = [8, 8], strides = [1, 1]} : vector<8x96xf32> to vector<8x8xf32>
    %131 = vector.extract_strided_slice %18 {offsets = [0, 72], sizes = [8, 8], strides = [1, 1]} : vector<8x96xf32> to vector<8x8xf32>
    %cst_52 = arith.constant dense<0.000000e+00> : vector<8x8xf32>
    %132 = tpu.matmul %129, %130, %cst_52 {dimension_numbers = #tpu.dot_dimension_numbers<[1], [1], [0], [0], [0, 0, 1, 0], [], []>} : vector<8x8xf32>, vector<8x8xf32>, vector<8x8xf32> -> vector<8x8xf32>
    %cst_53 = arith.constant dense<0xFF800000> : vector<8xf32>
    %133 = vector.multi_reduction <maximumf>, %132, %cst_53 [1] : vector<8x8xf32> to vector<8xf32>
    %134 = vector.shape_cast %133 : vector<8xf32> to vector<8x1xf32>
    %135 = vector.broadcast %134 : vector<8x1xf32> to vector<8x8xf32>
    %136 = arith.subf %132, %135 : vector<8x8xf32>
    %137 = math.exp %136 : vector<8x8xf32>
    %cst_54 = arith.constant dense<0.000000e+00> : vector<8xf32>
    %138 = vector.multi_reduction <add>, %137, %cst_54 [1] : vector<8x8xf32> to vector<8xf32>
    %139 = vector.shape_cast %138 : vector<8xf32> to vector<8x1xf32>
    %cst_55 = arith.constant dense<0.000000e+00> : vector<8x8xf32>
    %140 = tpu.matmul %137, %131, %cst_55 {dimension_numbers = #tpu.dot_dimension_numbers<[1], [0], [0], [1], [0, 0, 1, 1], [], []>} : vector<8x8xf32>, vector<8x8xf32>, vector<8x8xf32> -> vector<8x8xf32>
    %141 = tpu.reciprocal %139 : vector<8x1xf32> -> vector<8x1xf32>
    %142 = vector.broadcast %141 : vector<8x1xf32> to vector<8x8xf32>
    %143 = arith.mulf %140, %142 : vector<8x8xf32>
    %c0_56 = arith.constant 0 : index
    %c8_57 = arith.constant 8 : index
    %144 = vector.load %arg11[%c0_56, %c8_57] : memref<8x32xf32, #tpu.memory_space<vmem>>, vector<8x8xf32>
    tpu.vector_store %arg11[%c0_56, %c8_57], %143 {strides = array<i32>} : memref<8x32xf32, #tpu.memory_space<vmem>>, vector<8x8xf32>,
    %145 = vector.extract_strided_slice %21 {offsets = [0, 16], sizes = [8, 8], strides = [1, 1]} : vector<8x96xf32> to vector<8x8xf32>
    %146 = vector.extract_strided_slice %18 {offsets = [0, 48], sizes = [8, 8], strides = [1, 1]} : vector<8x96xf32> to vector<8x8xf32>
    %147 = vector.extract_strided_slice %18 {offsets = [0, 80], sizes = [8, 8], strides = [1, 1]} : vector<8x96xf32> to vector<8x8xf32>
    %cst_58 = arith.constant dense<0.000000e+00> : vector<8x8xf32>
    %148 = tpu.matmul %145, %146, %cst_58 {dimension_numbers = #tpu.dot_dimension_numbers<[1], [1], [0], [0], [0, 0, 1, 0], [], []>} : vector<8x8xf32>, vector<8x8xf32>, vector<8x8xf32> -> vector<8x8xf32>
    %cst_59 = arith.constant dense<0xFF800000> : vector<8xf32>
    %149 = vector.multi_reduction <maximumf>, %148, %cst_59 [1] : vector<8x8xf32> to vector<8xf32>
    %150 = vector.shape_cast %149 : vector<8xf32> to vector<8x1xf32>
    %151 = vector.broadcast %150 : vector<8x1xf32> to vector<8x8xf32>
    %152 = arith.subf %148, %151 : vector<8x8xf32>
    %153 = math.exp %152 : vector<8x8xf32>
    %cst_60 = arith.constant dense<0.000000e+00> : vector<8xf32>
    %154 = vector.multi_reduction <add>, %153, %cst_60 [1] : vector<8x8xf32> to vector<8xf32>
    %155 = vector.shape_cast %154 : vector<8xf32> to vector<8x1xf32>
    %cst_61 = arith.constant dense<0.000000e+00> : vector<8x8xf32>
    %156 = tpu.matmul %153, %147, %cst_61 {dimension_numbers = #tpu.dot_dimension_numbers<[1], [0], [0], [1], [0, 0, 1, 1], [], []>} : vector<8x8xf32>, vector<8x8xf32>, vector<8x8xf32> -> vector<8x8xf32>
    %157 = tpu.reciprocal %155 : vector<8x1xf32> -> vector<8x1xf32>
    %158 = vector.broadcast %157 : vector<8x1xf32> to vector<8x8xf32>
    %159 = arith.mulf %156, %158 : vector<8x8xf32>
    %c0_62 = arith.constant 0 : index
    %c16_63 = arith.constant 16 : index
    %160 = vector.load %arg11[%c0_62, %c16_63] : memref<8x32xf32, #tpu.memory_space<vmem>>, vector<8x8xf32>
    tpu.vector_store %arg11[%c0_62, %c16_63], %159 {strides = array<i32>} : memref<8x32xf32, #tpu.memory_space<vmem>>, vector<8x8xf32>,
    %161 = vector.extract_strided_slice %21 {offsets = [0, 24], sizes = [8, 8], strides = [1, 1]} : vector<8x96xf32> to vector<8x8xf32>
    %162 = vector.extract_strided_slice %18 {offsets = [0, 56], sizes = [8, 8], strides = [1, 1]} : vector<8x96xf32> to vector<8x8xf32>
    %163 = vector.extract_strided_slice %18 {offsets = [0, 88], sizes = [8, 8], strides = [1, 1]} : vector<8x96xf32> to vector<8x8xf32>
    %cst_64 = arith.constant dense<0.000000e+00> : vector<8x8xf32>
    %164 = tpu.matmul %161, %162, %cst_64 {dimension_numbers = #tpu.dot_dimension_numbers<[1], [1], [0], [0], [0, 0, 1, 0], [], []>} : vector<8x8xf32>, vector<8x8xf32>, vector<8x8xf32> -> vector<8x8xf32>
    %cst_65 = arith.constant dense<0xFF800000> : vector<8xf32>
    %165 = vector.multi_reduction <maximumf>, %164, %cst_65 [1] : vector<8x8xf32> to vector<8xf32>
    %166 = vector.shape_cast %165 : vector<8xf32> to vector<8x1xf32>
    %167 = vector.broadcast %166 : vector<8x1xf32> to vector<8x8xf32>
    %168 = arith.subf %164, %167 : vector<8x8xf32>
    %169 = math.exp %168 : vector<8x8xf32>
    %cst_66 = arith.constant dense<0.000000e+00> : vector<8xf32>
    %170 = vector.multi_reduction <add>, %169, %cst_66 [1] : vector<8x8xf32> to vector<8xf32>
    %171 = vector.shape_cast %170 : vector<8xf32> to vector<8x1xf32>
    %cst_67 = arith.constant dense<0.000000e+00> : vector<8x8xf32>
    %172 = tpu.matmul %169, %163, %cst_67 {dimension_numbers = #tpu.dot_dimension_numbers<[1], [0], [0], [1], [0, 0, 1, 1], [], []>} : vector<8x8xf32>, vector<8x8xf32>, vector<8x8xf32> -> vector<8x8xf32>
    %173 = tpu.reciprocal %171 : vector<8x1xf32> -> vector<8x1xf32>
    %174 = vector.broadcast %173 : vector<8x1xf32> to vector<8x8xf32>
    %175 = arith.mulf %172, %174 : vector<8x8xf32>
    %c0_68 = arith.constant 0 : index
    %c24_69 = arith.constant 24 : index
    %176 = vector.load %arg11[%c0_68, %c24_69] : memref<8x32xf32, #tpu.memory_space<vmem>>, vector<8x8xf32>
    tpu.vector_store %arg11[%c0_68, %c24_69], %175 {strides = array<i32>} : memref<8x32xf32, #tpu.memory_space<vmem>>, vector<8x8xf32>,
    %c0_70 = arith.constant 0 : index
    %c0_71 = arith.constant 0 : index
    %177 = vector.load %arg11[%c0_70, %c0_71] : memref<8x32xf32, #tpu.memory_space<vmem>>, vector<8x32xf32>
    %cst_72 = arith.constant dense<0.000000e+00> : vector<8x32xf32>
    %178 = tpu.matmul %177, %8, %cst_72 {dimension_numbers = #tpu.dot_dimension_numbers<[1], [0], [0], [1], [0, 0, 1, 1], [], []>} : vector<8x32xf32>, vector<32x32xf32>, vector<8x32xf32> -> vector<8x32xf32>
    %179 = arith.addf %4, %178 : vector<8x32xf32>
    %180 = vector.broadcast %13 : vector<1x32xf32> to vector<8x32xf32>
    %181 = arith.addf %179, %180 : vector<8x32xf32>
    %cst_73 = arith.constant dense<0.000000e+00> : vector<8xf32>
    %182 = vector.multi_reduction <add>, %181, %cst_73 [1] : vector<8x32xf32> to vector<8xf32>
    %183 = vector.shape_cast %182 : vector<8xf32> to vector<8x1xf32>
    %cst_74 = arith.constant 3.200000e+01 : f32
    %184 = vector.broadcast %cst_74 : f32 to vector<8x1xf32>
    %185 = arith.divf %183, %184 : vector<8x1xf32>
    %186 = vector.broadcast %185 : vector<8x1xf32> to vector<8x32xf32>
    %187 = arith.subf %181, %186 : vector<8x32xf32>
    %188 = arith.mulf %187, %187 : vector<8x32xf32>
    %cst_75 = arith.constant dense<0.000000e+00> : vector<8xf32>
    %189 = vector.multi_reduction <add>, %188, %cst_75 [1] : vector<8x32xf32> to vector<8xf32>
    %190 = vector.shape_cast %189 : vector<8xf32> to vector<8x1xf32>
    %cst_76 = arith.constant 3.200000e+01 : f32
    %191 = vector.broadcast %cst_76 : f32 to vector<8x1xf32>
    %192 = arith.divf %190, %191 : vector<8x1xf32>
    %193 = vector.broadcast %185 : vector<8x1xf32> to vector<8x32xf32>
    %194 = arith.subf %181, %193 : vector<8x32xf32>
    %cst_77 = arith.constant 9.99999974E-6 : f32
    %195 = vector.broadcast %cst_77 : f32 to vector<8x1xf32>
    %196 = arith.addf %192, %195 : vector<8x1xf32>
    %197 = math.rsqrt %196 : vector<8x1xf32>
    %198 = vector.broadcast %197 : vector<8x1xf32> to vector<8x32xf32>
    %199 = arith.mulf %194, %198 : vector<8x32xf32>
    %200 = vector.broadcast %14 : vector<1x32xf32> to vector<8x32xf32>
    %201 = arith.mulf %199, %200 : vector<8x32xf32>
    %202 = vector.broadcast %15 : vector<1x32xf32> to vector<8x32xf32>
    %203 = arith.addf %201, %202 : vector<8x32xf32>
    %c0_78 = arith.constant 0 : index
    %c0_79 = arith.constant 0 : index
    %204 = vector.load %arg9[%c0_78, %c0_79] : memref<8x32xf32, #tpu.memory_space<vmem>>, vector<8x32xf32>
    tpu.vector_store %arg9[%c0_78, %c0_79], %112 {strides = array<i32>} : memref<8x32xf32, #tpu.memory_space<vmem>>, vector<8x32xf32>,
    %c0_80 = arith.constant 0 : index
    %c0_81 = arith.constant 0 : index
    %205 = vector.load %arg10[%c0_80, %c0_81] : memref<8x32xf32, #tpu.memory_space<vmem>>, vector<8x32xf32>
    tpu.vector_store %arg10[%c0_80, %c0_81], %203 {strides = array<i32>} : memref<8x32xf32, #tpu.memory_space<vmem>>, vector<8x32xf32>,
    %c2_i32 = arith.constant 2 : i32
    %206 = arith.cmpi eq, %arg1, %c2_i32 : i32
    %207 = arith.extui %206 : i1 to i32
    %c0_i32_82 = arith.constant 0 : i32
    %208 = arith.cmpi ne, %207, %c0_i32_82 : i32
    scf.if %208 {
      %209 = arith.mulf %112, %203 : vector<8x32xf32>
      %210 = vector.shape_cast %209 : vector<8x32xf32> to vector<1x8x32xf32>
      %c0_83 = arith.constant 0 : index
      %c0_84 = arith.constant 0 : index
      %c0_85 = arith.constant 0 : index
      %211 = vector.load %arg8[%c0_83, %c0_84, %c0_85] : memref<1x8x32xf32, #tpu.memory_space<vmem>>, vector<1x8x32xf32>
      tpu.vector_store %arg8[%c0_83, %c0_84, %c0_85], %210 {strides = array<i32>} : memref<1x8x32xf32, #tpu.memory_space<vmem>>, vector<1x8x32xf32>,
    } else {
    }
    return
  }
  func.func @transform_0(%arg0: i32, %arg1: i32) -> (i32, i32, i32) {
    %c0_i32 = arith.constant 0 : i32
    %c0_i32_0 = arith.constant 0 : i32
    %c0_i32_1 = arith.constant 0 : i32
    return %arg0, %c0_i32, %c0_i32_0 : i32, i32, i32
  }
  func.func @transform_1(%arg0: i32, %arg1: i32) -> (i32, i32, i32) {
    %c0_i32 = arith.constant 0 : i32
    %c0_i32_0 = arith.constant 0 : i32
    %c0_i32_1 = arith.constant 0 : i32
    return %arg0, %c0_i32, %c0_i32_0 : i32, i32, i32
  }
  func.func @transform_2(%arg0: i32, %arg1: i32) -> (i32, i32, i32) {
    %c0_i32 = arith.constant 0 : i32
    %c0_i32_0 = arith.constant 0 : i32
    %c0_i32_1 = arith.constant 0 : i32
    return %arg1, %c0_i32, %c0_i32_0 : i32, i32, i32
  }
  func.func @transform_3(%arg0: i32, %arg1: i32) -> (i32, i32, i32) {
    %c0_i32 = arith.constant 0 : i32
    %c0_i32_0 = arith.constant 0 : i32
    %c0_i32_1 = arith.constant 0 : i32
    return %arg1, %c0_i32, %c0_i32_0 : i32, i32, i32
  }
  func.func @transform_4(%arg0: i32, %arg1: i32) -> (i32, i32, i32) {
    %c0_i32 = arith.constant 0 : i32
    %c0_i32_0 = arith.constant 0 : i32
    %c0_i32_1 = arith.constant 0 : i32
    return %arg1, %c0_i32, %c0_i32_0 : i32, i32, i32
  }
  func.func @transform_5(%arg0: i32, %arg1: i32) -> (i32, i32, i32) {
    %c0_i32 = arith.constant 0 : i32
    %c0_i32_0 = arith.constant 0 : i32
    %c0_i32_1 = arith.constant 0 : i32
    return %arg1, %c0_i32, %c0_i32_0 : i32, i32, i32
  }
  func.func @transform_6(%arg0: i32, %arg1: i32) -> (i32, i32, i32) {
    %c0_i32 = arith.constant 0 : i32
    %c0_i32_0 = arith.constant 0 : i32
    %c0_i32_1 = arith.constant 0 : i32
    return %arg0, %c0_i32, %c0_i32_0 : i32, i32, i32
  }
}

</mosaic_0001>

<llo_original>
// kernel: tpu_custom_call.1
$region0: #{tpu_custom_call.1}
  #allocation0 [shape = 'u32[]', space=smem, size = 0x4, offset = 0x4, fixed_abs, tag = 'smem constant byte address 0x4 - core index']
  #allocation1 [shape = 'u32[72,128]{1,0:T(1,128)}', space=vmem, size = 0x9000, scoped, tag = 'internal scratch']
  #allocation2 [shape = 'f32[8,32]{1,0:T(8,128)}', space=vmem, size = 0x1000, scoped, tag = 'scratch operand']
  #allocation3 [shape = 'f32[8,32]{1,0:T(8,128)}', space=vmem, size = 0x1000, scoped, tag = 'scratch operand']
  #allocation4 [shape = 'f32[8,32]{1,0:T(8,128)}', space=vmem, size = 0x1000, scoped, tag = 'scratch operand']
  %s0 = inlined_call_operand.hbm [shape: f32[2,8,32], index: 0, kind: input, shape index: {}]
  %s1 = inlined_call_operand.hbm [shape: f32[2,8,32], index: 1, kind: input, shape index: {}]
  %s2 = inlined_call_operand.hbm [shape: f32[3,32,96], index: 2, kind: input, shape index: {}]
  %s3 = inlined_call_operand.hbm [shape: f32[3,32,32], index: 3, kind: input, shape index: {}]
  %s4 = inlined_call_operand.vmem [shape: f32[3,1,96], index: 4, kind: input, shape index: {}]
  %s5 = inlined_call_operand.hbm [shape: f32[3,3,32], index: 5, kind: input, shape index: {}]
  %s6 = inlined_call_operand.hbm [shape: f32[2,8,32], index: 6, kind: output, shape index: {}]
  %s7 = sld [smem:[#allocation0]]
  $region85: #{tpu_custom_call.1} parent=0
    _
  %s9 = ssub.s32 1, %s7
  %s10 = scalar_select 0, %s9, %s7
  $region1: #{tpu_custom_call.1} parent=0
    #allocation5 [shape = 'u8[8192]{0}', space=vmem, size = 0x2000, scoped, tag = 'input window, operand 0']
    #allocation6 [shape = 's32[2]{0}', space=sflag, size = 0x8, scoped, tag = 'scoped memory for tpu_custom_call.1']
    #allocation7 [shape = 's32[2]{0}', space=sflag, size = 0x8, scoped, tag = 'scoped memory for tpu_custom_call.1']
    #allocation8 [shape = 'u8[8192]{0}', space=vmem, size = 0x2000, scoped, tag = 'input window, operand 1']
    #allocation9 [shape = 's32[2]{0}', space=sflag, size = 0x8, scoped, tag = 'scoped memory for tpu_custom_call.1']
    #allocation10 [shape = 'u8[32768]{0}', space=vmem, size = 0x8000, scoped, tag = 'input window, operand 2']
    #allocation11 [shape = 'u8[32768]{0}', space=vmem, size = 0x8000, scoped, tag = 'input window, operand 3']
    #allocation12 [shape = 's32[2]{0}', space=sflag, size = 0x8, scoped, tag = 'scoped memory for tpu_custom_call.1']
    #allocation13 [shape = 'u8[4096]{0}', space=vmem, size = 0x1000, scoped, tag = 'input window, operand 5']
    #allocation14 [shape = 'u8[8192]{0}', space=vmem, size = 0x2000, scoped, tag = 'output window, operand 0']
    %11 = vsyncpa [#allocation6], 0
    %s12 = scalar_lea.sflag [#allocation6], 1
    %13 = vsyncpa %s12, 0
    %14 = vsyncpa [#allocation9], 0
    %s15 = scalar_lea.sflag [#allocation9], 1
    %16 = vsyncpa %s15, 0
    %17 = vsyncpa [#allocation12], 0
    %s18 = scalar_lea.sflag [#allocation12], 1
    %19 = vsyncpa %s18, 0
    %20 = vsyncpa [#allocation7], 0
    %s21 = scalar_lea.sflag [#allocation7], 1
    %22 = vsyncpa %s21, 0
    loop: start=0, step=1, limit=8
    $region2: #{tpu_custom_call.1} parent=1 // loop_pre_header
      _
    $region3: #{tpu_custom_call.1} parent=1 // loop_header
      %s24 = sphi 0, %s28
      %p25 = scmp.ge.s32.totalorder %s24, 8
      %s31 = sphi 0, %s43
      %s32 = sphi 0, %s39
      %s33 = sphi 0, %s31
      %s34 = sphi 0, %s32
      %s35 = sphi 0, %s33
      %s36 = sphi 0, %s34
      %s46 = sphi 0, %s48
      %s49 = sphi 0, %s46
      %s50 = sphi 0, %s49
      %s66 = sphi 0, %s50
      %s72 = sphi 0, %s74
      %s75 = sphi 0, %s72
      %s76 = sphi 0, %s75
      %s92 = sphi 0, %s76
      %s98 = sphi 0, %s100
      %s101 = sphi 0, %s98
      %s102 = sphi 0, %s101
      %s118 = sphi 0, %s102
      %s124 = sphi 0, %s126
      %s127 = sphi 0, %s124
      %s128 = sphi 0, %s127
      %s144 = sphi 0, %s128
      %s150 = sphi 0, %s152
      %s153 = sphi 0, %s150
      %s154 = sphi 0, %s153
      %s170 = sphi 0, %s154
      %s176 = sphi 0, %s178
      %s179 = sphi 0, %s176
      %s180 = sphi 0, %s179
      %s196 = sphi 0, %s180
      %s202 = sphi 0, %s204
      %s205 = sphi 0, %s202
      %s206 = sphi 0, %s205
      %s222 = sphi 0, %s206
    $region4: #{tpu_custom_call.1} parent=1 // loop_header_branch
      %27 = sbr.rel (%p25) target = $region8
    $region5: #{tpu_custom_call.1} parent=1 // loop_body
      %s29 = ssub.s32 %s24, 1
      %s30 = ssub.s32 %s24, 2
      %s37 = sadd.s32 1, %s32
      %p38 = scmp.ge.s32.totalorder %s37, 3
      %s39 = scalar_select %p38, 0, %s37
      %s40 = sadd.s32 1, %s31
      %s41 = scalar_select %p38, %s40, %s31
      %p42 = scmp.ge.s32.totalorder %s41, 2
      %s43 = scalar_select %p42, 0, %s41
      %s44 = ssub.s32 %s31, %s43
      %p45 = scmp.eq.s32.totalorder %s44, 0
      %s47 = sadd.s32 %s46, 1
      %s48 = scalar_select %p45, %s46, %s47
      %p51 = pneg %p45
      %p52 = scmp.eq.s32.totalorder %s24, 5
      %p53 = por %p51, %p52
      %p54 = scmp.ne.s32.totalorder %s46, %s49
      %p55 = scmp.eq.s32.totalorder %s24, 0
      %p56 = por %p54, %p55
      %p57 = scmp.ne.s32.totalorder %s46, %s49
      %p58 = scmp.eq.s32.totalorder %s29, 5
      %p59 = por %p57, %p58
      %p60 = scmp.ne.s32.totalorder %s49, %s50
      %p61 = scmp.eq.s32.totalorder %s29, 0
      %p62 = por %p60, %p61
      %p63 = scmp.ne.s32.totalorder %s49, %s50
      %p64 = scmp.eq.s32.totalorder %s30, 5
      %p65 = por %p63, %p64
      %p67 = scmp.ne.s32.totalorder %s50, %s66
      %p68 = scmp.eq.s32.totalorder %s30, 0
      %p69 = por %p67, %p68
      %s70 = ssub.s32 %s31, %s43
      %p71 = scmp.eq.s32.totalorder %s70, 0
      %s73 = sadd.s32 %s72, 1
      %s74 = scalar_select %p71, %s72, %s73
      %p77 = pneg %p71
      %p78 = scmp.eq.s32.totalorder %s24, 5
      %p79 = por %p77, %p78
      %p80 = scmp.ne.s32.totalorder %s72, %s75
      %p81 = scmp.eq.s32.totalorder %s24, 0
      %p82 = por %p80, %p81
      %p83 = scmp.ne.s32.totalorder %s72, %s75
      %p84 = scmp.eq.s32.totalorder %s29, 5
      %p85 = por %p83, %p84
      %p86 = scmp.ne.s32.totalorder %s75, %s76
      %p87 = scmp.eq.s32.totalorder %s29, 0
      %p88 = por %p86, %p87
      %p89 = scmp.ne.s32.totalorder %s75, %s76
      %p90 = scmp.eq.s32.totalorder %s30, 5
      %p91 = por %p89, %p90
      %p93 = scmp.ne.s32.totalorder %s76, %s92
      %p94 = scmp.eq.s32.totalorder %s30, 0
      %p95 = por %p93, %p94
      %s96 = ssub.s32 %s32, %s39
      %p97 = scmp.eq.s32.totalorder %s96, 0
      %s99 = sadd.s32 %s98, 1
      %s100 = scalar_select %p97, %s98, %s99
      %p103 = pneg %p97
      %p104 = scmp.eq.s32.totalorder %s24, 5
      %p105 = por %p103, %p104
      %p106 = scmp.ne.s32.totalorder %s98, %s101
      %p107 = scmp.eq.s32.totalorder %s24, 0
      %p108 = por %p106, %p107
      %p109 = scmp.ne.s32.totalorder %s98, %s101
      %p110 = scmp.eq.s32.totalorder %s29, 5
      %p111 = por %p109, %p110
      %p112 = scmp.ne.s32.totalorder %s101, %s102
      %p113 = scmp.eq.s32.totalorder %s29, 0
      %p114 = por %p112, %p113
      %p115 = scmp.ne.s32.totalorder %s101, %s102
      %p116 = scmp.eq.s32.totalorder %s30, 5
      %p117 = por %p115, %p116
      %p119 = scmp.ne.s32.totalorder %s102, %s118
      %p120 = scmp.eq.s32.totalorder %s30, 0
      %p121 = por %p119, %p120
      %s122 = ssub.s32 %s32, %s39
      %p123 = scmp.eq.s32.totalorder %s122, 0
      %s125 = sadd.s32 %s124, 1
      %s126 = scalar_select %p123, %s124, %s125
      %p129 = pneg %p123
      %p130 = scmp.eq.s32.totalorder %s24, 5
      %p131 = por %p129, %p130
      %p132 = scmp.ne.s32.totalorder %s124, %s127
      %p133 = scmp.eq.s32.totalorder %s24, 0
      %p134 = por %p132, %p133
      %p135 = scmp.ne.s32.totalorder %s124, %s127
      %p136 = scmp.eq.s32.totalorder %s29, 5
      %p137 = por %p135, %p136
      %p138 = scmp.ne.s32.totalorder %s127, %s128
      %p139 = scmp.eq.s32.totalorder %s29, 0
      %p140 = por %p138, %p139
      %p141 = scmp.ne.s32.totalorder %s127, %s128
      %p142 = scmp.eq.s32.totalorder %s30, 5
      %p143 = por %p141, %p142
      %p145 = scmp.ne.s32.totalorder %s128, %s144
      %p146 = scmp.eq.s32.totalorder %s30, 0
      %p147 = por %p145, %p146
      %s148 = ssub.s32 %s32, %s39
      %p149 = scmp.eq.s32.totalorder %s148, 0
      %s151 = sadd.s32 %s150, 1
      %s152 = scalar_select %p149, %s150, %s151
      %p155 = pneg %p149
      %p156 = scmp.eq.s32.totalorder %s24, 5
      %p157 = por %p155, %p156
      %p158 = scmp.ne.s32.totalorder %s150, %s153
      %p159 = scmp.eq.s32.totalorder %s24, 0
      %p160 = por %p158, %p159
      %p161 = scmp.ne.s32.totalorder %s150, %s153
      %p162 = scmp.eq.s32.totalorder %s29, 5
      %p163 = por %p161, %p162
      %p164 = scmp.ne.s32.totalorder %s153, %s154
      %p165 = scmp.eq.s32.totalorder %s29, 0
      %p166 = por %p164, %p165
      %p167 = scmp.ne.s32.totalorder %s153, %s154
      %p168 = scmp.eq.s32.totalorder %s30, 5
      %p169 = por %p167, %p168
      %p171 = scmp.ne.s32.totalorder %s154, %s170
      %p172 = scmp.eq.s32.totalorder %s30, 0
      %p173 = por %p171, %p172
      %s174 = ssub.s32 %s32, %s39
      %p175 = scmp.eq.s32.totalorder %s174, 0
      %s177 = sadd.s32 %s176, 1
      %s178 = scalar_select %p175, %s176, %s177
      %p181 = pneg %p175
      %p182 = scmp.eq.s32.totalorder %s24, 5
      %p183 = por %p181, %p182
      %p184 = scmp.ne.s32.totalorder %s176, %s179
      %p185 = scmp.eq.s32.totalorder %s24, 0
      %p186 = por %p184, %p185
      %p187 = scmp.ne.s32.totalorder %s176, %s179
      %p188 = scmp.eq.s32.totalorder %s29, 5
      %p189 = por %p187, %p188
      %p190 = scmp.ne.s32.totalorder %s179, %s180
      %p191 = scmp.eq.s32.totalorder %s29, 0
      %p192 = por %p190, %p191
      %p193 = scmp.ne.s32.totalorder %s179, %s180
      %p194 = scmp.eq.s32.totalorder %s30, 5
      %p195 = por %p193, %p194
      %p197 = scmp.ne.s32.totalorder %s180, %s196
      %p198 = scmp.eq.s32.totalorder %s30, 0
      %p199 = por %p197, %p198
      %s200 = ssub.s32 %s31, %s43
      %p201 = scmp.eq.s32.totalorder %s200, 0
      %s203 = sadd.s32 %s202, 1
      %s204 = scalar_select %p201, %s202, %s203
      %p207 = pneg %p201
      %p208 = scmp.eq.s32.totalorder %s24, 5
      %p209 = por %p207, %p208
      %p210 = scmp.ne.s32.totalorder %s202, %s205
      %p211 = scmp.eq.s32.totalorder %s24, 0
      %p212 = por %p210, %p211
      %p213 = scmp.ne.s32.totalorder %s202, %s205
      %p214 = scmp.eq.s32.totalorder %s29, 5
      %p215 = por %p213, %p214
      %p216 = scmp.ne.s32.totalorder %s205, %s206
      %p217 = scmp.eq.s32.totalorder %s29, 0
      %p218 = por %p216, %p217
      %p219 = scmp.ne.s32.totalorder %s205, %s206
      %p220 = scmp.eq.s32.totalorder %s30, 5
      %p221 = por %p219, %p220
      %p223 = scmp.ne.s32.totalorder %s206, %s222
      %p224 = scmp.eq.s32.totalorder %s30, 0
      %p225 = por %p223, %p224
      %p226 = scmp.le.s32.totalorder 1, %s24
      %p227 = scmp.lt.s32.totalorder %s24, 7
      %p228 = pnand %p226, %p227
      %p229 = pneg %p228
      // Predicated region
      $region9: #{tpu_custom_call.1} parent=5 // pred_check
        _
      $region10: #{tpu_custom_call.1} parent=5 // pred_check_branch
        %231 = sbr.rel (%p228) target = $region12
      $region11: #{tpu_custom_call.1} parent=5 // pred_region
        %s232 = ssub.s32 %s24, 1
      $region12: #{tpu_custom_call.1} parent=5 // pred_fallthru
        _
      %p233 = scmp.lt.s32.totalorder %s24, 6
      // Predicated region
      $region13: #{tpu_custom_call.1} parent=5 // pred_check
        %p234 = pneg %p233
      $region14: #{tpu_custom_call.1} parent=5 // pred_check_branch
        %236 = sbr.rel (%p234) target = $region16
      $region15: #{tpu_custom_call.1} parent=5 // pred_region
        // Predicated region
        $region17: #{tpu_custom_call.1} parent=15 // pred_check
          %p237 = pneg %p56
        $region18: #{tpu_custom_call.1} parent=15 // pred_check_branch
          %239 = sbr.rel (%p237) target = $region20
        $region19: #{tpu_custom_call.1} parent=15 // pred_region
          %s240 = sand.u32 %s46, 1
          %s241 = scalar_lea.sflag [#allocation6], %s240
          %s242 = sand.u32 %s46, 1
          %s243 = smul.addr %s242, 8
          %s244 = scalar_lea.vmem [#allocation5], %s243
          %246 = vsyncadd %s241, 0
          %s247 = smul.addr %s31, 8
          %s248 = scalar_lea.hbm %s0, %s247
          %s250 = sshll.u32 %s248, 4
          %s251 = int_to_ptr.hbm [resolvable:$true] %s250
          %s252 = sshll.u32 %s244, 4
          %s253 = int_to_ptr.vmem [resolvable:$true] %s252
          %255 = dma.hbm_to_vmem [thread:$0]  %s251, 128, %s253, %s241
        $region20: #{tpu_custom_call.1} parent=15 // pred_fallthru
          _
        // Predicated region
        $region21: #{tpu_custom_call.1} parent=15 // pred_check
          %p256 = pneg %p82
        $region22: #{tpu_custom_call.1} parent=15 // pred_check_branch
          %258 = sbr.rel (%p256) target = $region24
        $region23: #{tpu_custom_call.1} parent=15 // pred_region
          %s259 = sand.u32 %s24, 1
          %s260 = scalar_lea.sflag [#allocation9], %s259
          %s261 = sand.u32 %s72, 1
          %s262 = smul.addr %s261, 8
          %s263 = scalar_lea.vmem [#allocation8], %s262
          %265 = vsyncadd %s260, 0
          %s266 = smul.addr %s31, 8
          %s267 = scalar_lea.hbm %s1, %s266
          %s269 = sshll.u32 %s267, 4
          %s270 = int_to_ptr.hbm [resolvable:$true] %s269
          %s271 = sshll.u32 %s263, 4
          %s272 = int_to_ptr.vmem [resolvable:$true] %s271
          %274 = dma.hbm_to_vmem [thread:$0]  %s270, 128, %s272, %s260
        $region24: #{tpu_custom_call.1} parent=15 // pred_fallthru
          _
        // Predicated region
        $region25: #{tpu_custom_call.1} parent=15 // pred_check
          %p275 = pneg %p108
        $region26: #{tpu_custom_call.1} parent=15 // pred_check_branch
          %277 = sbr.rel (%p275) target = $region28
        $region27: #{tpu_custom_call.1} parent=15 // pred_region
          %s278 = sand.u32 %s24, 1
          %s279 = scalar_lea.sflag [#allocation9], %s278
          %s280 = sand.u32 %s98, 1
          %s281 = smul.addr %s280, 32
          %s282 = scalar_lea.vmem [#allocation10], %s281
          %284 = vsyncadd %s279, 0
          %s285 = smul.addr %s32, 4
          %s286 = smul.addr %s285, 8
          %s287 = scalar_lea.hbm %s2, %s286
          %s288 = sshll.u32 %s287, 4
          %s289 = int_to_ptr.hbm [resolvable:$true] %s288
          %s290 = sshll.u32 %s282, 4
          %s291 = int_to_ptr.vmem [resolvable:$true] %s290
          %296 = dma.hbm_to_vmem [thread:$0]  %s289, 512, %s291, %s279, 128, 128, 8
        $region28: #{tpu_custom_call.1} parent=15 // pred_fallthru
          _
        // Predicated region
        $region29: #{tpu_custom_call.1} parent=15 // pred_check
          %p297 = pneg %p134
        $region30: #{tpu_custom_call.1} parent=15 // pred_check_branch
          %299 = sbr.rel (%p297) target = $region32
        $region31: #{tpu_custom_call.1} parent=15 // pred_region
          %s300 = sand.u32 %s24, 1
          %s301 = scalar_lea.sflag [#allocation12], %s300
          %s302 = sand.u32 %s124, 1
          %s303 = smul.addr %s302, 32
          %s304 = scalar_lea.vmem [#allocation11], %s303
          %306 = vsyncadd %s301, 0
          %s307 = smul.addr %s32, 4
          %s308 = smul.addr %s307, 8
          %s309 = scalar_lea.hbm %s3, %s308
          %s310 = sshll.u32 %s309, 4
          %s311 = int_to_ptr.hbm [resolvable:$true] %s310
          %s312 = sshll.u32 %s304, 4
          %s313 = int_to_ptr.vmem [resolvable:$true] %s312
          %318 = dma.hbm_to_vmem [thread:$0]  %s311, 512, %s313, %s301, 128, 128, 8
        $region32: #{tpu_custom_call.1} parent=15 // pred_fallthru
          _
        // Predicated region
        $region33: #{tpu_custom_call.1} parent=15 // pred_check
          %p319 = pneg %p160
        $region34: #{tpu_custom_call.1} parent=15 // pred_check_branch
          %321 = sbr.rel (%p319) target = $region36
        $region35: #{tpu_custom_call.1} parent=15 // pred_region
          %p322 = scmp.lt.s32.totalorder %s32, 2
          %s323 = scalar_select %p322, %s32, 2
          %s324 = scalar_lea.vmem %s4, %s323
        $region36: #{tpu_custom_call.1} parent=15 // pred_fallthru
          _
        // Predicated region
        $region37: #{tpu_custom_call.1} parent=15 // pred_check
          %p325 = pneg %p186
        $region38: #{tpu_custom_call.1} parent=15 // pred_check_branch
          %327 = sbr.rel (%p325) target = $region40
        $region39: #{tpu_custom_call.1} parent=15 // pred_region
          %s328 = sand.u32 %s24, 1
          %s329 = scalar_lea.sflag [#allocation12], %s328
          %s330 = sand.u32 %s176, 1
          %s331 = smul.addr %s330, 4
          %s332 = scalar_lea.vmem [#allocation13], %s331
          %334 = vsyncadd %s329, 0
          %s335 = smul.addr %s32, 4
          %s336 = scalar_lea.hbm %s5, %s335
          %s338 = sshll.u32 %s336, 4
          %s339 = int_to_ptr.hbm [resolvable:$true] %s338
          %s340 = sshll.u32 %s332, 4
          %s341 = int_to_ptr.vmem [resolvable:$true] %s340
          %343 = dma.hbm_to_vmem [thread:$0]  %s339, 64, %s341, %s329
        $region40: #{tpu_custom_call.1} parent=15 // pred_fallthru
          _
      $region16: #{tpu_custom_call.1} parent=5 // pred_fallthru
        _
      %p344 = scmp.le.s32.totalorder 1, %s24
      %p345 = scmp.lt.s32.totalorder %s24, 7
      %p346 = pnand %p344, %p345
      %p347 = pneg %p346
      // Predicated region
      $region41: #{tpu_custom_call.1} parent=5 // pred_check
        _
      $region42: #{tpu_custom_call.1} parent=5 // pred_check_branch
        %349 = sbr.rel (%p346) target = $region44
      $region43: #{tpu_custom_call.1} parent=5 // pred_region
        %s350 = ssub.s32 %s24, 1
        %s351 = sand.u32 %s49, 1
        %s352 = scalar_lea.sflag [#allocation6], %s351
        %s353 = sand.u32 %s49, 1
        %s354 = smul.addr %s353, 8
        %s355 = scalar_lea.vmem [#allocation5], %s354
        // Predicated region
        $region45: #{tpu_custom_call.1} parent=43 // pred_check
          %p356 = pneg %p62
        $region46: #{tpu_custom_call.1} parent=43 // pred_check_branch
          %358 = sbr.rel (%p356) target = $region48
        $region47: #{tpu_custom_call.1} parent=43 // pred_region
          %360 = dma.done %s352, 128
        $region48: #{tpu_custom_call.1} parent=43 // pred_fallthru
          _
        %s361 = sand.u32 %s29, 1
        %s362 = scalar_lea.sflag [#allocation9], %s361
        %s363 = sand.u32 %s75, 1
        %s364 = smul.addr %s363, 8
        %s365 = scalar_lea.vmem [#allocation8], %s364
        // Predicated region
        $region49: #{tpu_custom_call.1} parent=43 // pred_check
          %p366 = pneg %p88
        $region50: #{tpu_custom_call.1} parent=43 // pred_check_branch
          %368 = sbr.rel (%p366) target = $region52
        $region51: #{tpu_custom_call.1} parent=43 // pred_region
          %370 = dma.done %s362, 128
        $region52: #{tpu_custom_call.1} parent=43 // pred_fallthru
          _
        %s371 = sand.u32 %s29, 1
        %s372 = scalar_lea.sflag [#allocation9], %s371
        %s373 = sand.u32 %s101, 1
        %s374 = smul.addr %s373, 32
        %s375 = scalar_lea.vmem [#allocation10], %s374
        // Predicated region
        $region53: #{tpu_custom_call.1} parent=43 // pred_check
          %p376 = pneg %p114
        $region54: #{tpu_custom_call.1} parent=43 // pred_check_branch
          %378 = sbr.rel (%p376) target = $region56
        $region55: #{tpu_custom_call.1} parent=43 // pred_region
          %380 = dma.done %s372, 512
        $region56: #{tpu_custom_call.1} parent=43 // pred_fallthru
          _
        %s381 = sand.u32 %s29, 1
        %s382 = scalar_lea.sflag [#allocation12], %s381
        %s383 = sand.u32 %s127, 1
        %s384 = smul.addr %s383, 32
        %s385 = scalar_lea.vmem [#allocation11], %s384
        // Predicated region
        $region57: #{tpu_custom_call.1} parent=43 // pred_check
          %p386 = pneg %p140
        $region58: #{tpu_custom_call.1} parent=43 // pred_check_branch
          %388 = sbr.rel (%p386) target = $region60
        $region59: #{tpu_custom_call.1} parent=43 // pred_region
          %390 = dma.done %s382, 512
        $region60: #{tpu_custom_call.1} parent=43 // pred_fallthru
          _
        %s391 = sand.u32 %s29, 1
        %s392 = scalar_lea.sflag [#allocation12], %s391
        %s393 = sand.u32 %s179, 1
        %s394 = smul.addr %s393, 4
        %s395 = scalar_lea.vmem [#allocation13], %s394
        // Predicated region
        $region61: #{tpu_custom_call.1} parent=43 // pred_check
          %p396 = pneg %p192
        $region62: #{tpu_custom_call.1} parent=43 // pred_check_branch
          %398 = sbr.rel (%p396) target = $region64
        $region63: #{tpu_custom_call.1} parent=43 // pred_region
          %400 = dma.done %s392, 64
        $region64: #{tpu_custom_call.1} parent=43 // pred_fallthru
          _
        %s401 = sand.u32 %s49, 1
        %s402 = scalar_lea.sflag [#allocation6], %s401
        %s403 = sand.u32 %s49, 1
        %s404 = smul.addr %s403, 8
        %s405 = scalar_lea.vmem [#allocation5], %s404
        %p406 = pneg %p62
        %p407 = pneg %p59
        %s408 = sand.u32 %s29, 1
        %s409 = scalar_lea.sflag [#allocation9], %s408
        %s410 = sand.u32 %s75, 1
        %s411 = smul.addr %s410, 8
        %s412 = scalar_lea.vmem [#allocation8], %s411
        %p413 = pneg %p88
        %p414 = pneg %p85
        %s415 = sand.u32 %s29, 1
        %s416 = scalar_lea.sflag [#allocation9], %s415
        %s417 = sand.u32 %s101, 1
        %s418 = smul.addr %s417, 32
        %s419 = scalar_lea.vmem [#allocation10], %s418
        %p420 = pneg %p114
        %p421 = pneg %p111
        %s422 = sand.u32 %s29, 1
        %s423 = scalar_lea.sflag [#allocation12], %s422
        %s424 = sand.u32 %s127, 1
        %s425 = smul.addr %s424, 32
        %s426 = scalar_lea.vmem [#allocation11], %s425
        %p427 = pneg %p140
        %p428 = pneg %p137
        %p429 = scmp.lt.s32.totalorder %s34, 2
        %s430 = scalar_select %p429, %s34, 2
        %s431 = scalar_lea.vmem %s4, %s430
        %p432 = pneg %p166
        %p433 = pneg %p163
        %s434 = sand.u32 %s29, 1
        %s435 = scalar_lea.sflag [#allocation12], %s434
        %s436 = sand.u32 %s179, 1
        %s437 = smul.addr %s436, 4
        %s438 = scalar_lea.vmem [#allocation13], %s437
        %p439 = pneg %p192
        %p440 = pneg %p189
        %p441 = pneg %p218
        %p442 = pneg %p215
        %s443 = sand.u32 %s205, 1
        %s444 = scalar_lea.sflag [#allocation7], %s443
        %s445 = sand.u32 %s205, 1
        %s446 = smul.addr %s445, 8
        %s447 = scalar_lea.vmem [#allocation14], %s446
        %p448 = scmp.lt.s32.totalorder %s34, 2
        %s449 = scalar_select %p448, %s34, 2
        %s450 = scalar_lea.vmem %s4, %s449
        %p451 = scmp.eq.s32.totalorder %s34, 0
        // Predicated region
        $region65: #{tpu_custom_call.1} parent=43 // pred_check
          %p452 = pneg %p451
        $region66: #{tpu_custom_call.1} parent=43 // pred_check_branch
          %454 = sbr.rel (%p452) target = $region68
        $region67: #{tpu_custom_call.1} parent=43 // pred_region
          %v455 = vld [vmem:[%s355] sm:$0xff]
          %vm456 = vcmask 261120
          %457 = vst.msk [vmem:[#allocation2] sm:$0xff] %vm456, %v455
          %v458 = vld [vmem:[%s365] sm:$0xff]
          %459 = vst.msk [vmem:[#allocation3] sm:$0xff] %vm456, %v458
        $region68: #{tpu_custom_call.1} parent=43 // pred_fallthru
          _
        %v460 = vld [vmem:[#allocation2] sm:$0xff]
        %v461 = vld [vmem:[#allocation3] sm:$0xff]
        %v462 = vld [vmem:[%s375] sm:$0xff]
        %v463 = vld [vmem:[%s375 + $0x8] sm:$0xff]
        %v464 = vld [vmem:[%s375 + $0x10] sm:$0xff]
        %v465 = vld [vmem:[%s375 + $0x18] sm:$0xff]
        %v466 = vld [vmem:[%s385] sm:$0xff]
        %v467 = vld [vmem:[%s385 + $0x8] sm:$0xff]
        %v468 = vld [vmem:[%s385 + $0x10] sm:$0xff]
        %v469 = vld [vmem:[%s385 + $0x18] sm:$0xff]
        %v470 = vld [vmem:[%s450] sm:$0x1]
        %v471 = vld [vmem:[%s395] sm:$0x7]
        %v473 = vperm.slane %v470, 0
        %vm475 = vcmask 261120
        %v477 = vsel %vm475, %v460, 0
        %479 = vmatpush.msra.mxu0 0.0
        %480 = vmatpush.msra.mxu0 0.0
        %481 = vmatpush.msra.mxu0 0.0
        %482 = vmatpush.msra.mxu0 0.0
        %483 = vmatpush.msra.mxu0 0.0
        %484 = vmatpush.msra.mxu0 0.0
        %485 = vmatpush.msra.mxu0 0.0
        %486 = vmatpush.msra.mxu0 0.0
        %487 = vmatpush.msra.mxu0 0.0
        %488 = vmatpush.msra.mxu0 0.0
        %489 = vmatpush.msra.mxu0 0.0
        %490 = vmatpush.msra.mxu0 0.0
        %491 = vmatpush.msra.mxu0 %v465
        %492 = vmatpush.msra.mxu0 %v464
        %493 = vmatpush.msra.mxu0 %v463
        %494 = vmatpush.msra.mxu0 %v462
        %495 = vmatmul.f32.gmra.mxu0 %v477
        %v496 = vpop.f32.mrf.mxu0
        %v497 = vadd.f32 %v473, %v496
        %498 = vdwg.mxu0
        %v500 = vsel %vm475, %v461, 0
        %502 = vmatpush.msra.mxu0 0.0
        %503 = vmatpush.msra.mxu0 0.0
        %504 = vmatpush.msra.mxu0 0.0
        %505 = vmatpush.msra.mxu0 0.0
        %506 = vmatpush.msra.mxu0 0.0
        %507 = vmatpush.msra.mxu0 0.0
        %508 = vmatpush.msra.mxu0 0.0
        %509 = vmatpush.msra.mxu0 0.0
        %510 = vmatpush.msra.mxu0 0.0
        %511 = vmatpush.msra.mxu0 0.0
        %512 = vmatpush.msra.mxu0 0.0
        %513 = vmatpush.msra.mxu0 0.0
        %514 = vmatpush.msra.mxu0 %v465
        %515 = vmatpush.msra.mxu0 %v464
        %516 = vmatpush.msra.mxu0 %v463
        %517 = vmatpush.msra.mxu0 %v462
        %518 = vmatmul.f32.gmra.mxu0 %v500
        %v519 = vpop.f32.mrf.mxu0
        %v520 = vadd.f32 %v473, %v519
        %521 = vdwg.mxu0
        %523 = vrot.lane.b32.xlu0 %v520, 96
        %v524 = vpop.permute.xlu0 %523
        %vm525 = vcmask 64512
        %v527 = vsel %vm525, %v497, 0
        %v529 = vsel %vm525, %v524, 0
        %531 = vmatpush.xpose.msra.mxu0 0.0
        %532 = vmatpush.xpose.msra.mxu0 0.0
        %533 = vmatpush.xpose.msra.mxu0 0.0
        %534 = vmatpush.xpose.msra.mxu0 0.0
        %535 = vmatpush.xpose.msra.mxu0 0.0
        %536 = vmatpush.xpose.msra.mxu0 0.0
        %537 = vmatpush.xpose.msra.mxu0 0.0
        %538 = vmatpush.xpose.msra.mxu0 0.0
        %539 = vmatpush.xpose.msra.mxu0 0.0
        %540 = vmatpush.xpose.msra.mxu0 0.0
        %541 = vmatpush.xpose.msra.mxu0 0.0
        %542 = vmatpush.xpose.msra.mxu0 0.0
        %543 = vmatpush.xpose.msra.mxu0 0.0
        %544 = vmatpush.xpose.msra.mxu0 0.0
        %545 = vmatpush.xpose.msra.mxu0 0.0
        %546 = vmatpush.xpose.msra.mxu0 %v529
        %547 = vmatmul.f32.gmra.mxu0 %v527
        %v548 = vpop.f32.mrf.mxu0
        %v549 = vadd.f32 0.0, %v548
        %550 = vdwg.mxu0
        %v551 = vsel %vm525, %v549, -inf
        %552 = vmax.xlane.f32.xlu0 %v551
        %v553 = vpop.xlane.xlu0 %552
        %v554 = vsub.f32 %v549, %v553
        %v555 = vmul.f32 %v554, 1.442695
        %v556 = vpow.pop %v555
        %v557 = vsel %vm525, %v556, 0.0
        %558 = vadd.xlane.f32.xlu0 %v557
        %v559 = vpop.xlane.xlu0 %558
        %560 = vrot.lane.b32.xlu0 %v520, 64
        %v561 = vpop.permute.xlu0 %560
        %v564 = vsel %vm525, %v556, 0
        %566 = vmatpush.msra.mxu0 0.0
        %567 = vmatpush.msra.mxu0 0.0
        %568 = vmatpush.msra.mxu0 0.0
        %569 = vmatpush.msra.mxu0 0.0
        %570 = vmatpush.msra.mxu0 0.0
        %571 = vmatpush.msra.mxu0 0.0
        %572 = vmatpush.msra.mxu0 0.0
        %573 = vmatpush.msra.mxu0 0.0
        %574 = vmatpush.msra.mxu0 0.0
        %575 = vmatpush.msra.mxu0 0.0
        %576 = vmatpush.msra.mxu0 0.0
        %577 = vmatpush.msra.mxu0 0.0
        %578 = vmatpush.msra.mxu0 0.0
        %579 = vmatpush.msra.mxu0 0.0
        %580 = vmatpush.msra.mxu0 0.0
        %581 = vmatpush.msra.mxu0 %v561
        %582 = vmatmul.f32.gmra.mxu0 %v564
        %v583 = vpop.f32.mrf.mxu0
        %v584 = vadd.f32 0.0, %v583
        %585 = vdwg.mxu0
        %v586 = vrcp.pop %v559
        %v587 = vmul.f32 %v559, %v586
        %v588 = vsub.f32 1.0, %v587
        %v589 = vmul.f32 %v586, %v588
        %v590 = vadd.f32 %v586, %v589
        %vm591 = vweird.f32 %v559
        %vm592 = vweird.f32 %v586
        %vm593 = vmor %vm591, %vm592
        %v594 = vsel %vm593, %v586, %v590
        %v595 = vand.u32 2147483647, %v559
        %vm596 = vcmp.eq.f32.partialorder %v595, 8.507059e+37
        %v597 = vand.u32 %v559, 2147483648
        %v598 = vor.u32 1.1754944e-38, %v597
        %v599 = vsel %vm596, %v598, %v594
        %v600 = vmul.f32 %v584, %v599
        %601 = vst.msk [vmem:[#allocation4] sm:$0xff] %vm525, %v600
        %602 = vrot.lane.b32.xlu0 %v497, 120
        %v603 = vpop.permute.xlu0 %602
        %604 = vrot.lane.b32.xlu0 %v520, 88
        %v605 = vpop.permute.xlu0 %604
        %v606 = vsel %vm525, %v603, 0
        %v608 = vsel %vm525, %v605, 0
        %610 = vmatpush.xpose.msra.mxu0 0.0
        %611 = vmatpush.xpose.msra.mxu0 0.0
        %612 = vmatpush.xpose.msra.mxu0 0.0
        %613 = vmatpush.xpose.msra.mxu0 0.0
        %614 = vmatpush.xpose.msra.mxu0 0.0
        %615 = vmatpush.xpose.msra.mxu0 0.0
        %616 = vmatpush.xpose.msra.mxu0 0.0
        %617 = vmatpush.xpose.msra.mxu0 0.0
        %618 = vmatpush.xpose.msra.mxu0 0.0
        %619 = vmatpush.xpose.msra.mxu0 0.0
        %620 = vmatpush.xpose.msra.mxu0 0.0
        %621 = vmatpush.xpose.msra.mxu0 0.0
        %622 = vmatpush.xpose.msra.mxu0 0.0
        %623 = vmatpush.xpose.msra.mxu0 0.0
        %624 = vmatpush.xpose.msra.mxu0 0.0
        %625 = vmatpush.xpose.msra.mxu0 %v608
        %626 = vmatmul.f32.gmra.mxu0 %v606
        %v627 = vpop.f32.mrf.mxu0
        %v628 = vadd.f32 0.0, %v627
        %629 = vdwg.mxu0
        %v630 = vsel %vm525, %v628, -inf
        %631 = vmax.xlane.f32.xlu0 %v630
        %v632 = vpop.xlane.xlu0 %631
        %v633 = vsub.f32 %v628, %v632
        %v634 = vmul.f32 %v633, 1.442695
        %v635 = vpow.pop %v634
        %v636 = vsel %vm525, %v635, 0.0
        %637 = vadd.xlane.f32.xlu0 %v636
        %v638 = vpop.xlane.xlu0 %637
        %639 = vrot.lane.b32.xlu0 %v520, 56
        %v640 = vpop.permute.xlu0 %639
        %v643 = vsel %vm525, %v635, 0
        %645 = vmatpush.msra.mxu0 0.0
        %646 = vmatpush.msra.mxu0 0.0
        %647 = vmatpush.msra.mxu0 0.0
        %648 = vmatpush.msra.mxu0 0.0
        %649 = vmatpush.msra.mxu0 0.0
        %650 = vmatpush.msra.mxu0 0.0
        %651 = vmatpush.msra.mxu0 0.0
        %652 = vmatpush.msra.mxu0 0.0
        %653 = vmatpush.msra.mxu0 0.0
        %654 = vmatpush.msra.mxu0 0.0
        %655 = vmatpush.msra.mxu0 0.0
        %656 = vmatpush.msra.mxu0 0.0
        %657 = vmatpush.msra.mxu0 0.0
        %658 = vmatpush.msra.mxu0 0.0
        %659 = vmatpush.msra.mxu0 0.0
        %660 = vmatpush.msra.mxu0 %v640
        %661 = vmatmul.f32.gmra.mxu0 %v643
        %v662 = vpop.f32.mrf.mxu0
        %v663 = vadd.f32 0.0, %v662
        %664 = vdwg.mxu0
        %v665 = vrcp.pop %v638
        %v666 = vmul.f32 %v638, %v665
        %v667 = vsub.f32 1.0, %v666
        %v668 = vmul.f32 %v665, %v667
        %v669 = vadd.f32 %v665, %v668
        %vm670 = vweird.f32 %v638
        %vm671 = vweird.f32 %v665
        %vm672 = vmor %vm670, %vm671
        %v673 = vsel %vm672, %v665, %v669
        %v674 = vand.u32 2147483647, %v638
        %vm675 = vcmp.eq.f32.partialorder %v674, 8.507059e+37
        %v676 = vand.u32 %v638, 2147483648
        %v677 = vor.u32 1.1754944e-38, %v676
        %v678 = vsel %vm675, %v677, %v673
        %v679 = vmul.f32 %v663, %v678
        %681 = vrot.lane.b32.xlu0 %v679, 8
        %v682 = vpop.permute.xlu0 %681
        %vm684 = vcmask 130112
        %685 = vst.msk [vmem:[#allocation4] sm:$0xff] %vm684, %v682
        %686 = vrot.lane.b32.xlu0 %v497, 112
        %v687 = vpop.permute.xlu0 %686
        %688 = vrot.lane.b32.xlu0 %v520, 80
        %v689 = vpop.permute.xlu0 %688
        %v690 = vsel %vm525, %v687, 0
        %v692 = vsel %vm525, %v689, 0
        %694 = vmatpush.xpose.msra.mxu0 0.0
        %695 = vmatpush.xpose.msra.mxu0 0.0
        %696 = vmatpush.xpose.msra.mxu0 0.0
        %697 = vmatpush.xpose.msra.mxu0 0.0
        %698 = vmatpush.xpose.msra.mxu0 0.0
        %699 = vmatpush.xpose.msra.mxu0 0.0
        %700 = vmatpush.xpose.msra.mxu0 0.0
        %701 = vmatpush.xpose.msra.mxu0 0.0
        %702 = vmatpush.xpose.msra.mxu0 0.0
        %703 = vmatpush.xpose.msra.mxu0 0.0
        %704 = vmatpush.xpose.msra.mxu0 0.0
        %705 = vmatpush.xpose.msra.mxu0 0.0
        %706 = vmatpush.xpose.msra.mxu0 0.0
        %707 = vmatpush.xpose.msra.mxu0 0.0
        %708 = vmatpush.xpose.msra.mxu0 0.0
        %709 = vmatpush.xpose.msra.mxu0 %v692
        %710 = vmatmul.f32.gmra.mxu0 %v690
        %v711 = vpop.f32.mrf.mxu0
        %v712 = vadd.f32 0.0, %v711
        %713 = vdwg.mxu0
        %v714 = vsel %vm525, %v712, -inf
        %715 = vmax.xlane.f32.xlu0 %v714
        %v716 = vpop.xlane.xlu0 %715
        %v717 = vsub.f32 %v712, %v716
        %v718 = vmul.f32 %v717, 1.442695
        %v719 = vpow.pop %v718
        %v720 = vsel %vm525, %v719, 0.0
        %721 = vadd.xlane.f32.xlu0 %v720
        %v722 = vpop.xlane.xlu0 %721
        %723 = vrot.lane.b32.xlu0 %v520, 48
        %v724 = vpop.permute.xlu0 %723
        %v727 = vsel %vm525, %v719, 0
        %729 = vmatpush.msra.mxu0 0.0
        %730 = vmatpush.msra.mxu0 0.0
        %731 = vmatpush.msra.mxu0 0.0
        %732 = vmatpush.msra.mxu0 0.0
        %733 = vmatpush.msra.mxu0 0.0
        %734 = vmatpush.msra.mxu0 0.0
        %735 = vmatpush.msra.mxu0 0.0
        %736 = vmatpush.msra.mxu0 0.0
        %737 = vmatpush.msra.mxu0 0.0
        %738 = vmatpush.msra.mxu0 0.0
        %739 = vmatpush.msra.mxu0 0.0
        %740 = vmatpush.msra.mxu0 0.0
        %741 = vmatpush.msra.mxu0 0.0
        %742 = vmatpush.msra.mxu0 0.0
        %743 = vmatpush.msra.mxu0 0.0
        %744 = vmatpush.msra.mxu0 %v724
        %745 = vmatmul.f32.gmra.mxu0 %v727
        %v746 = vpop.f32.mrf.mxu0
        %v747 = vadd.f32 0.0, %v746
        %748 = vdwg.mxu0
        %v749 = vrcp.pop %v722
        %v750 = vmul.f32 %v722, %v749
        %v751 = vsub.f32 1.0, %v750
        %v752 = vmul.f32 %v749, %v751
        %v753 = vadd.f32 %v749, %v752
        %vm754 = vweird.f32 %v722
        %vm755 = vweird.f32 %v749
        %vm756 = vmor %vm754, %vm755
        %v757 = vsel %vm756, %v749, %v753
        %v758 = vand.u32 2147483647, %v722
        %vm759 = vcmp.eq.f32.partialorder %v758, 8.507059e+37
        %v760 = vand.u32 %v722, 2147483648
        %v761 = vor.u32 1.1754944e-38, %v760
        %v762 = vsel %vm759, %v761, %v757
        %v763 = vmul.f32 %v747, %v762
        %765 = vrot.lane.b32.xlu0 %v763, 16
        %v766 = vpop.permute.xlu0 %765
        %vm768 = vcmask 195712
        %769 = vst.msk [vmem:[#allocation4] sm:$0xff] %vm768, %v766
        %770 = vrot.lane.b32.xlu0 %v497, 104
        %v771 = vpop.permute.xlu0 %770
        %772 = vrot.lane.b32.xlu0 %v520, 72
        %v773 = vpop.permute.xlu0 %772
        %v774 = vsel %vm525, %v771, 0
        %v776 = vsel %vm525, %v773, 0
        %778 = vmatpush.xpose.msra.mxu0 0.0
        %779 = vmatpush.xpose.msra.mxu0 0.0
        %780 = vmatpush.xpose.msra.mxu0 0.0
        %781 = vmatpush.xpose.msra.mxu0 0.0
        %782 = vmatpush.xpose.msra.mxu0 0.0
        %783 = vmatpush.xpose.msra.mxu0 0.0
        %784 = vmatpush.xpose.msra.mxu0 0.0
        %785 = vmatpush.xpose.msra.mxu0 0.0
        %786 = vmatpush.xpose.msra.mxu0 0.0
        %787 = vmatpush.xpose.msra.mxu0 0.0
        %788 = vmatpush.xpose.msra.mxu0 0.0
        %789 = vmatpush.xpose.msra.mxu0 0.0
        %790 = vmatpush.xpose.msra.mxu0 0.0
        %791 = vmatpush.xpose.msra.mxu0 0.0
        %792 = vmatpush.xpose.msra.mxu0 0.0
        %793 = vmatpush.xpose.msra.mxu0 %v776
        %794 = vmatmul.f32.gmra.mxu0 %v774
        %v795 = vpop.f32.mrf.mxu0
        %v796 = vadd.f32 0.0, %v795
        %797 = vdwg.mxu0
        %v798 = vsel %vm525, %v796, -inf
        %799 = vmax.xlane.f32.xlu0 %v798
        %v800 = vpop.xlane.xlu0 %799
        %v801 = vsub.f32 %v796, %v800
        %v802 = vmul.f32 %v801, 1.442695
        %v803 = vpow.pop %v802
        %v804 = vsel %vm525, %v803, 0.0
        %805 = vadd.xlane.f32.xlu0 %v804
        %v806 = vpop.xlane.xlu0 %805
        %807 = vrot.lane.b32.xlu0 %v520, 40
        %v808 = vpop.permute.xlu0 %807
        %v811 = vsel %vm525, %v803, 0
        %813 = vmatpush.msra.mxu0 0.0
        %814 = vmatpush.msra.mxu0 0.0
        %815 = vmatpush.msra.mxu0 0.0
        %816 = vmatpush.msra.mxu0 0.0
        %817 = vmatpush.msra.mxu0 0.0
        %818 = vmatpush.msra.mxu0 0.0
        %819 = vmatpush.msra.mxu0 0.0
        %820 = vmatpush.msra.mxu0 0.0
        %821 = vmatpush.msra.mxu0 0.0
        %822 = vmatpush.msra.mxu0 0.0
        %823 = vmatpush.msra.mxu0 0.0
        %824 = vmatpush.msra.mxu0 0.0
        %825 = vmatpush.msra.mxu0 0.0
        %826 = vmatpush.msra.mxu0 0.0
        %827 = vmatpush.msra.mxu0 0.0
        %828 = vmatpush.msra.mxu0 %v808
        %829 = vmatmul.f32.gmra.mxu0 %v811
        %v830 = vpop.f32.mrf.mxu0
        %v831 = vadd.f32 0.0, %v830
        %832 = vdwg.mxu0
        %v833 = vrcp.pop %v806
        %v834 = vmul.f32 %v806, %v833
        %v835 = vsub.f32 1.0, %v834
        %v836 = vmul.f32 %v833, %v835
        %v837 = vadd.f32 %v833, %v836
        %vm838 = vweird.f32 %v806
        %vm839 = vweird.f32 %v833
        %vm840 = vmor %vm838, %vm839
        %v841 = vsel %vm840, %v833, %v837
        %v842 = vand.u32 2147483647, %v806
        %vm843 = vcmp.eq.f32.partialorder %v842, 8.507059e+37
        %v844 = vand.u32 %v806, 2147483648
        %v845 = vor.u32 1.1754944e-38, %v844
        %v846 = vsel %vm843, %v845, %v841
        %v847 = vmul.f32 %v831, %v846
        %849 = vrot.lane.b32.xlu0 %v847, 24
        %v850 = vpop.permute.xlu0 %849
        %vm852 = vcmask 261312
        %853 = vst.msk [vmem:[#allocation4] sm:$0xff] %vm852, %v850
        %v854 = vld [vmem:[#allocation4] sm:$0xff]
        %v856 = vsel %vm475, %v854, 0
        %858 = vmatpush.msra.mxu0 0.0
        %859 = vmatpush.msra.mxu0 0.0
        %860 = vmatpush.msra.mxu0 0.0
        %861 = vmatpush.msra.mxu0 0.0
        %862 = vmatpush.msra.mxu0 0.0
        %863 = vmatpush.msra.mxu0 0.0
        %864 = vmatpush.msra.mxu0 0.0
        %865 = vmatpush.msra.mxu0 0.0
        %866 = vmatpush.msra.mxu0 0.0
        %867 = vmatpush.msra.mxu0 0.0
        %868 = vmatpush.msra.mxu0 0.0
        %869 = vmatpush.msra.mxu0 0.0
        %870 = vmatpush.msra.mxu0 %v469
        %871 = vmatpush.msra.mxu0 %v468
        %872 = vmatpush.msra.mxu0 %v467
        %873 = vmatpush.msra.mxu0 %v466
        %874 = vmatmul.f32.gmra.mxu0 %v856
        %v875 = vpop.f32.mrf.mxu0
        %v876 = vadd.f32 0.0, %v875
        %877 = vdwg.mxu0
        %v878 = vadd.f32 %v460, %v876
        %v879 = vperm.slane %v471, 0
        %v880 = vadd.f32 %v878, %v879
        %v881 = vsel %vm475, %v880, 0.0
        %882 = vadd.xlane.f32.xlu0 %v881
        %v883 = vpop.xlane.xlu0 %882
        %v884 = vrcp.pop 32.0
        %v885 = vmul.f32 32.0, %v884
        %v886 = vsub.f32 1.0, %v885
        %v887 = vmul.f32 %v884, %v886
        %v888 = vadd.f32 %v884, %v887
        %vm889 = vweird.f32 %v884
        %v890 = vsel %vm889, %v884, %v888
        %v891 = vmul.f32 %v883, %v890
        %v892 = vsub.f32 %v880, %v891
        %v893 = vmul.f32 %v892, %v892
        %v894 = vsel %vm475, %v893, 0.0
        %895 = vadd.xlane.f32.xlu0 %v894
        %v896 = vpop.xlane.xlu0 %895
        %v897 = vmul.f32 %v896, %v890
        %v898 = vadd.f32 %v897, 1e-05
        %v899 = vrsqrt.pop %v898
        %v900 = vmul.f32 %v899, %v898
        %v901 = vmul.f32 %v900, %v899
        %v902 = vmul.f32 0.5, %v901
        %v903 = vsub.f32 1.5, %v902
        %v904 = vmul.f32 %v899, %v903
        %vm905 = vweird.f32 %v898
        %vm906 = vweird.f32 %v899
        %vm907 = vmor %vm905, %vm906
        %v908 = vsel %vm907, %v899, %v904
        %v909 = vmul.f32 %v892, %v908
        %v910 = vperm.slane %v471, 1
        %v911 = vmul.f32 %v909, %v910
        %v912 = vperm.slane %v471, 2
        %v913 = vadd.f32 %v911, %v912
        %914 = vrot.lane.b32.xlu0 %v497, 96
        %v915 = vpop.permute.xlu0 %914
        %v916 = vsel %vm525, %v520, 0
        %v918 = vsel %vm525, %v915, 0
        %920 = vmatpush.xpose.msra.mxu0 0.0
        %921 = vmatpush.xpose.msra.mxu0 0.0
        %922 = vmatpush.xpose.msra.mxu0 0.0
        %923 = vmatpush.xpose.msra.mxu0 0.0
        %924 = vmatpush.xpose.msra.mxu0 0.0
        %925 = vmatpush.xpose.msra.mxu0 0.0
        %926 = vmatpush.xpose.msra.mxu0 0.0
        %927 = vmatpush.xpose.msra.mxu0 0.0
        %928 = vmatpush.xpose.msra.mxu0 0.0
        %929 = vmatpush.xpose.msra.mxu0 0.0
        %930 = vmatpush.xpose.msra.mxu0 0.0
        %931 = vmatpush.xpose.msra.mxu0 0.0
        %932 = vmatpush.xpose.msra.mxu0 0.0
        %933 = vmatpush.xpose.msra.mxu0 0.0
        %934 = vmatpush.xpose.msra.mxu0 0.0
        %935 = vmatpush.xpose.msra.mxu0 %v918
        %936 = vmatmul.f32.gmra.mxu0 %v916
        %v937 = vpop.f32.mrf.mxu0
        %v938 = vadd.f32 0.0, %v937
        %939 = vdwg.mxu0
        %v940 = vsel %vm525, %v938, -inf
        %941 = vmax.xlane.f32.xlu0 %v940
        %v942 = vpop.xlane.xlu0 %941
        %v943 = vsub.f32 %v938, %v942
        %v944 = vmul.f32 %v943, 1.442695
        %v945 = vpow.pop %v944
        %v946 = vsel %vm525, %v945, 0.0
        %947 = vadd.xlane.f32.xlu0 %v946
        %v948 = vpop.xlane.xlu0 %947
        %949 = vrot.lane.b32.xlu0 %v497, 64
        %v950 = vpop.permute.xlu0 %949
        %v953 = vsel %vm525, %v945, 0
        %955 = vmatpush.msra.mxu0 0.0
        %956 = vmatpush.msra.mxu0 0.0
        %957 = vmatpush.msra.mxu0 0.0
        %958 = vmatpush.msra.mxu0 0.0
        %959 = vmatpush.msra.mxu0 0.0
        %960 = vmatpush.msra.mxu0 0.0
        %961 = vmatpush.msra.mxu0 0.0
        %962 = vmatpush.msra.mxu0 0.0
        %963 = vmatpush.msra.mxu0 0.0
        %964 = vmatpush.msra.mxu0 0.0
        %965 = vmatpush.msra.mxu0 0.0
        %966 = vmatpush.msra.mxu0 0.0
        %967 = vmatpush.msra.mxu0 0.0
        %968 = vmatpush.msra.mxu0 0.0
        %969 = vmatpush.msra.mxu0 0.0
        %970 = vmatpush.msra.mxu0 %v950
        %971 = vmatmul.f32.gmra.mxu0 %v953
        %v972 = vpop.f32.mrf.mxu0
        %v973 = vadd.f32 0.0, %v972
        %974 = vdwg.mxu0
        %v975 = vrcp.pop %v948
        %v976 = vmul.f32 %v948, %v975
        %v977 = vsub.f32 1.0, %v976
        %v978 = vmul.f32 %v975, %v977
        %v979 = vadd.f32 %v975, %v978
        %vm980 = vweird.f32 %v948
        %vm981 = vweird.f32 %v975
        %vm982 = vmor %vm980, %vm981
        %v983 = vsel %vm982, %v975, %v979
        %v984 = vand.u32 2147483647, %v948
        %vm985 = vcmp.eq.f32.partialorder %v984, 8.507059e+37
        %v986 = vand.u32 %v948, 2147483648
        %v987 = vor.u32 1.1754944e-38, %v986
        %v988 = vsel %vm985, %v987, %v983
        %v989 = vmul.f32 %v973, %v988
        %990 = vst.msk [vmem:[#allocation4] sm:$0xff] %vm525, %v989
        %991 = vrot.lane.b32.xlu0 %v520, 120
        %v992 = vpop.permute.xlu0 %991
        %993 = vrot.lane.b32.xlu0 %v497, 88
        %v994 = vpop.permute.xlu0 %993
        %v995 = vsel %vm525, %v992, 0
        %v997 = vsel %vm525, %v994, 0
        %999 = vmatpush.xpose.msra.mxu0 0.0
        %1000 = vmatpush.xpose.msra.mxu0 0.0
        %1001 = vmatpush.xpose.msra.mxu0 0.0
        %1002 = vmatpush.xpose.msra.mxu0 0.0
        %1003 = vmatpush.xpose.msra.mxu0 0.0
        %1004 = vmatpush.xpose.msra.mxu0 0.0
        %1005 = vmatpush.xpose.msra.mxu0 0.0
        %1006 = vmatpush.xpose.msra.mxu0 0.0
        %1007 = vmatpush.xpose.msra.mxu0 0.0
        %1008 = vmatpush.xpose.msra.mxu0 0.0
        %1009 = vmatpush.xpose.msra.mxu0 0.0
        %1010 = vmatpush.xpose.msra.mxu0 0.0
        %1011 = vmatpush.xpose.msra.mxu0 0.0
        %1012 = vmatpush.xpose.msra.mxu0 0.0
        %1013 = vmatpush.xpose.msra.mxu0 0.0
        %1014 = vmatpush.xpose.msra.mxu0 %v997
        %1015 = vmatmul.f32.gmra.mxu0 %v995
        %v1016 = vpop.f32.mrf.mxu0
        %v1017 = vadd.f32 0.0, %v1016
        %1018 = vdwg.mxu0
        %v1019 = vsel %vm525, %v1017, -inf
        %1020 = vmax.xlane.f32.xlu0 %v1019
        %v1021 = vpop.xlane.xlu0 %1020
        %v1022 = vsub.f32 %v1017, %v1021
        %v1023 = vmul.f32 %v1022, 1.442695
        %v1024 = vpow.pop %v1023
        %v1025 = vsel %vm525, %v1024, 0.0
        %1026 = vadd.xlane.f32.xlu0 %v1025
        %v1027 = vpop.xlane.xlu0 %1026
        %1028 = vrot.lane.b32.xlu0 %v497, 56
        %v1029 = vpop.permute.xlu0 %1028
        %v1032 = vsel %vm525, %v1024, 0
        %1034 = vmatpush.msra.mxu0 0.0
        %1035 = vmatpush.msra.mxu0 0.0
        %1036 = vmatpush.msra.mxu0 0.0
        %1037 = vmatpush.msra.mxu0 0.0
        %1038 = vmatpush.msra.mxu0 0.0
        %1039 = vmatpush.msra.mxu0 0.0
        %1040 = vmatpush.msra.mxu0 0.0
        %1041 = vmatpush.msra.mxu0 0.0
        %1042 = vmatpush.msra.mxu0 0.0
        %1043 = vmatpush.msra.mxu0 0.0
        %1044 = vmatpush.msra.mxu0 0.0
        %1045 = vmatpush.msra.mxu0 0.0
        %1046 = vmatpush.msra.mxu0 0.0
        %1047 = vmatpush.msra.mxu0 0.0
        %1048 = vmatpush.msra.mxu0 0.0
        %1049 = vmatpush.msra.mxu0 %v1029
        %1050 = vmatmul.f32.gmra.mxu0 %v1032
        %v1051 = vpop.f32.mrf.mxu0
        %v1052 = vadd.f32 0.0, %v1051
        %1053 = vdwg.mxu0
        %v1054 = vrcp.pop %v1027
        %v1055 = vmul.f32 %v1027, %v1054
        %v1056 = vsub.f32 1.0, %v1055
        %v1057 = vmul.f32 %v1054, %v1056
        %v1058 = vadd.f32 %v1054, %v1057
        %vm1059 = vweird.f32 %v1027
        %vm1060 = vweird.f32 %v1054
        %vm1061 = vmor %vm1059, %vm1060
        %v1062 = vsel %vm1061, %v1054, %v1058
        %v1063 = vand.u32 2147483647, %v1027
        %vm1064 = vcmp.eq.f32.partialorder %v1063, 8.507059e+37
        %v1065 = vand.u32 %v1027, 2147483648
        %v1066 = vor.u32 1.1754944e-38, %v1065
        %v1067 = vsel %vm1064, %v1066, %v1062
        %v1068 = vmul.f32 %v1052, %v1067
        %1070 = vrot.lane.b32.xlu0 %v1068, 8
        %v1071 = vpop.permute.xlu0 %1070
        %1073 = vst.msk [vmem:[#allocation4] sm:$0xff] %vm684, %v1071
        %1074 = vrot.lane.b32.xlu0 %v520, 112
        %v1075 = vpop.permute.xlu0 %1074
        %1076 = vrot.lane.b32.xlu0 %v497, 80
        %v1077 = vpop.permute.xlu0 %1076
        %v1078 = vsel %vm525, %v1075, 0
        %v1080 = vsel %vm525, %v1077, 0
        %1082 = vmatpush.xpose.msra.mxu0 0.0
        %1083 = vmatpush.xpose.msra.mxu0 0.0
        %1084 = vmatpush.xpose.msra.mxu0 0.0
        %1085 = vmatpush.xpose.msra.mxu0 0.0
        %1086 = vmatpush.xpose.msra.mxu0 0.0
        %1087 = vmatpush.xpose.msra.mxu0 0.0
        %1088 = vmatpush.xpose.msra.mxu0 0.0
        %1089 = vmatpush.xpose.msra.mxu0 0.0
        %1090 = vmatpush.xpose.msra.mxu0 0.0
        %1091 = vmatpush.xpose.msra.mxu0 0.0
        %1092 = vmatpush.xpose.msra.mxu0 0.0
        %1093 = vmatpush.xpose.msra.mxu0 0.0
        %1094 = vmatpush.xpose.msra.mxu0 0.0
        %1095 = vmatpush.xpose.msra.mxu0 0.0
        %1096 = vmatpush.xpose.msra.mxu0 0.0
        %1097 = vmatpush.xpose.msra.mxu0 %v1080
        %1098 = vmatmul.f32.gmra.mxu0 %v1078
        %v1099 = vpop.f32.mrf.mxu0
        %v1100 = vadd.f32 0.0, %v1099
        %1101 = vdwg.mxu0
        %v1102 = vsel %vm525, %v1100, -inf
        %1103 = vmax.xlane.f32.xlu0 %v1102
        %v1104 = vpop.xlane.xlu0 %1103
        %v1105 = vsub.f32 %v1100, %v1104
        %v1106 = vmul.f32 %v1105, 1.442695
        %v1107 = vpow.pop %v1106
        %v1108 = vsel %vm525, %v1107, 0.0
        %1109 = vadd.xlane.f32.xlu0 %v1108
        %v1110 = vpop.xlane.xlu0 %1109
        %1111 = vrot.lane.b32.xlu0 %v497, 48
        %v1112 = vpop.permute.xlu0 %1111
        %v1115 = vsel %vm525, %v1107, 0
        %1117 = vmatpush.msra.mxu0 0.0
        %1118 = vmatpush.msra.mxu0 0.0
        %1119 = vmatpush.msra.mxu0 0.0
        %1120 = vmatpush.msra.mxu0 0.0
        %1121 = vmatpush.msra.mxu0 0.0
        %1122 = vmatpush.msra.mxu0 0.0
        %1123 = vmatpush.msra.mxu0 0.0
        %1124 = vmatpush.msra.mxu0 0.0
        %1125 = vmatpush.msra.mxu0 0.0
        %1126 = vmatpush.msra.mxu0 0.0
        %1127 = vmatpush.msra.mxu0 0.0
        %1128 = vmatpush.msra.mxu0 0.0
        %1129 = vmatpush.msra.mxu0 0.0
        %1130 = vmatpush.msra.mxu0 0.0
        %1131 = vmatpush.msra.mxu0 0.0
        %1132 = vmatpush.msra.mxu0 %v1112
        %1133 = vmatmul.f32.gmra.mxu0 %v1115
        %v1134 = vpop.f32.mrf.mxu0
        %v1135 = vadd.f32 0.0, %v1134
        %1136 = vdwg.mxu0
        %v1137 = vrcp.pop %v1110
        %v1138 = vmul.f32 %v1110, %v1137
        %v1139 = vsub.f32 1.0, %v1138
        %v1140 = vmul.f32 %v1137, %v1139
        %v1141 = vadd.f32 %v1137, %v1140
        %vm1142 = vweird.f32 %v1110
        %vm1143 = vweird.f32 %v1137
        %vm1144 = vmor %vm1142, %vm1143
        %v1145 = vsel %vm1144, %v1137, %v1141
        %v1146 = vand.u32 2147483647, %v1110
        %vm1147 = vcmp.eq.f32.partialorder %v1146, 8.507059e+37
        %v1148 = vand.u32 %v1110, 2147483648
        %v1149 = vor.u32 1.1754944e-38, %v1148
        %v1150 = vsel %vm1147, %v1149, %v1145
        %v1151 = vmul.f32 %v1135, %v1150
        %1153 = vrot.lane.b32.xlu0 %v1151, 16
        %v1154 = vpop.permute.xlu0 %1153
        %1156 = vst.msk [vmem:[#allocation4] sm:$0xff] %vm768, %v1154
        %1157 = vrot.lane.b32.xlu0 %v520, 104
        %v1158 = vpop.permute.xlu0 %1157
        %1159 = vrot.lane.b32.xlu0 %v497, 72
        %v1160 = vpop.permute.xlu0 %1159
        %v1161 = vsel %vm525, %v1158, 0
        %v1163 = vsel %vm525, %v1160, 0
        %1165 = vmatpush.xpose.msra.mxu0 0.0
        %1166 = vmatpush.xpose.msra.mxu0 0.0
        %1167 = vmatpush.xpose.msra.mxu0 0.0
        %1168 = vmatpush.xpose.msra.mxu0 0.0
        %1169 = vmatpush.xpose.msra.mxu0 0.0
        %1170 = vmatpush.xpose.msra.mxu0 0.0
        %1171 = vmatpush.xpose.msra.mxu0 0.0
        %1172 = vmatpush.xpose.msra.mxu0 0.0
        %1173 = vmatpush.xpose.msra.mxu0 0.0
        %1174 = vmatpush.xpose.msra.mxu0 0.0
        %1175 = vmatpush.xpose.msra.mxu0 0.0
        %1176 = vmatpush.xpose.msra.mxu0 0.0
        %1177 = vmatpush.xpose.msra.mxu0 0.0
        %1178 = vmatpush.xpose.msra.mxu0 0.0
        %1179 = vmatpush.xpose.msra.mxu0 0.0
        %1180 = vmatpush.xpose.msra.mxu0 %v1163
        %1181 = vmatmul.f32.gmra.mxu0 %v1161
        %v1182 = vpop.f32.mrf.mxu0
        %v1183 = vadd.f32 0.0, %v1182
        %1184 = vdwg.mxu0
        %v1185 = vsel %vm525, %v1183, -inf
        %1186 = vmax.xlane.f32.xlu0 %v1185
        %v1187 = vpop.xlane.xlu0 %1186
        %v1188 = vsub.f32 %v1183, %v1187
        %v1189 = vmul.f32 %v1188, 1.442695
        %v1190 = vpow.pop %v1189
        %v1191 = vsel %vm525, %v1190, 0.0
        %1192 = vadd.xlane.f32.xlu0 %v1191
        %v1193 = vpop.xlane.xlu0 %1192
        %1194 = vrot.lane.b32.xlu0 %v497, 40
        %v1195 = vpop.permute.xlu0 %1194
        %v1198 = vsel %vm525, %v1190, 0
        %1200 = vmatpush.msra.mxu0 0.0
        %1201 = vmatpush.msra.mxu0 0.0
        %1202 = vmatpush.msra.mxu0 0.0
        %1203 = vmatpush.msra.mxu0 0.0
        %1204 = vmatpush.msra.mxu0 0.0
        %1205 = vmatpush.msra.mxu0 0.0
        %1206 = vmatpush.msra.mxu0 0.0
        %1207 = vmatpush.msra.mxu0 0.0
        %1208 = vmatpush.msra.mxu0 0.0
        %1209 = vmatpush.msra.mxu0 0.0
        %1210 = vmatpush.msra.mxu0 0.0
        %1211 = vmatpush.msra.mxu0 0.0
        %1212 = vmatpush.msra.mxu0 0.0
        %1213 = vmatpush.msra.mxu0 0.0
        %1214 = vmatpush.msra.mxu0 0.0
        %1215 = vmatpush.msra.mxu0 %v1195
        %1216 = vmatmul.f32.gmra.mxu0 %v1198
        %v1217 = vpop.f32.mrf.mxu0
        %v1218 = vadd.f32 0.0, %v1217
        %1219 = vdwg.mxu0
        %v1220 = vrcp.pop %v1193
        %v1221 = vmul.f32 %v1193, %v1220
        %v1222 = vsub.f32 1.0, %v1221
        %v1223 = vmul.f32 %v1220, %v1222
        %v1224 = vadd.f32 %v1220, %v1223
        %vm1225 = vweird.f32 %v1193
        %vm1226 = vweird.f32 %v1220
        %vm1227 = vmor %vm1225, %vm1226
        %v1228 = vsel %vm1227, %v1220, %v1224
        %v1229 = vand.u32 2147483647, %v1193
        %vm1230 = vcmp.eq.f32.partialorder %v1229, 8.507059e+37
        %v1231 = vand.u32 %v1193, 2147483648
        %v1232 = vor.u32 1.1754944e-38, %v1231
        %v1233 = vsel %vm1230, %v1232, %v1228
        %v1234 = vmul.f32 %v1218, %v1233
        %1236 = vrot.lane.b32.xlu0 %v1234, 24
        %v1237 = vpop.permute.xlu0 %1236
        %1239 = vst.msk [vmem:[#allocation4] sm:$0xff] %vm852, %v1237
        %v1240 = vld [vmem:[#allocation4] sm:$0xff]
        %v1242 = vsel %vm475, %v1240, 0
        %1244 = vmatpush.msra.mxu0 0.0
        %1245 = vmatpush.msra.mxu0 0.0
        %1246 = vmatpush.msra.mxu0 0.0
        %1247 = vmatpush.msra.mxu0 0.0
        %1248 = vmatpush.msra.mxu0 0.0
        %1249 = vmatpush.msra.mxu0 0.0
        %1250 = vmatpush.msra.mxu0 0.0
        %1251 = vmatpush.msra.mxu0 0.0
        %1252 = vmatpush.msra.mxu0 0.0
        %1253 = vmatpush.msra.mxu0 0.0
        %1254 = vmatpush.msra.mxu0 0.0
        %1255 = vmatpush.msra.mxu0 0.0
        %1256 = vmatpush.msra.mxu0 %v469
        %1257 = vmatpush.msra.mxu0 %v468
        %1258 = vmatpush.msra.mxu0 %v467
        %1259 = vmatpush.msra.mxu0 %v466
        %1260 = vmatmul.f32.gmra.mxu0 %v1242
        %v1261 = vpop.f32.mrf.mxu0
        %v1262 = vadd.f32 0.0, %v1261
        %1263 = vdwg.mxu0
        %v1264 = vadd.f32 %v461, %v1262
        %v1265 = vadd.f32 %v1264, %v879
        %v1266 = vsel %vm475, %v1265, 0.0
        %1267 = vadd.xlane.f32.xlu0 %v1266
        %v1268 = vpop.xlane.xlu0 %1267
        %v1269 = vmul.f32 %v1268, %v890
        %v1270 = vsub.f32 %v1265, %v1269
        %v1271 = vmul.f32 %v1270, %v1270
        %v1272 = vsel %vm475, %v1271, 0.0
        %1273 = vadd.xlane.f32.xlu0 %v1272
        %v1274 = vpop.xlane.xlu0 %1273
        %v1275 = vmul.f32 %v1274, %v890
        %v1276 = vadd.f32 %v1275, 1e-05
        %v1277 = vrsqrt.pop %v1276
        %v1278 = vmul.f32 %v1277, %v1276
        %v1279 = vmul.f32 %v1278, %v1277
        %v1280 = vmul.f32 0.5, %v1279
        %v1281 = vsub.f32 1.5, %v1280
        %v1282 = vmul.f32 %v1277, %v1281
        %vm1283 = vweird.f32 %v1276
        %vm1284 = vweird.f32 %v1277
        %vm1285 = vmor %vm1283, %vm1284
        %v1286 = vsel %vm1285, %v1277, %v1282
        %v1287 = vmul.f32 %v1270, %v1286
        %v1288 = vmul.f32 %v1287, %v910
        %v1289 = vadd.f32 %v1288, %v912
        %1290 = vst.msk [vmem:[#allocation2] sm:$0xff] %vm475, %v913
        %1291 = vst.msk [vmem:[#allocation3] sm:$0xff] %vm475, %v1289
        %p1292 = scmp.eq.s32.totalorder %s34, 2
        // Predicated region
        $region69: #{tpu_custom_call.1} parent=43 // pred_check
          %p1293 = pneg %p1292
        $region70: #{tpu_custom_call.1} parent=43 // pred_check_branch
          %1295 = sbr.rel (%p1293) target = $region72
        $region71: #{tpu_custom_call.1} parent=43 // pred_region
          %v1296 = vmul.f32 %v913, %v1289
          %1297 = vst.msk [vmem:[%s447] sm:$0xff] %vm475, %v1296
        $region72: #{tpu_custom_call.1} parent=43 // pred_fallthru
          _
        %s1298 = sand.u32 %s205, 1
        %s1299 = scalar_lea.sflag [#allocation7], %s1298
        %s1300 = sand.u32 %s205, 1
        %s1301 = smul.addr %s1300, 8
        %s1302 = scalar_lea.vmem [#allocation14], %s1301
        // Predicated region
        $region73: #{tpu_custom_call.1} parent=43 // pred_check
          %p1303 = pneg %p215
        $region74: #{tpu_custom_call.1} parent=43 // pred_check_branch
          %1305 = sbr.rel (%p1303) target = $region76
        $region75: #{tpu_custom_call.1} parent=43 // pred_region
          %1307 = vsyncadd %s1299, 0
          %s1308 = smul.addr %s33, 8
          %s1309 = scalar_lea.hbm %s6, %s1308
          %s1311 = sshll.u32 %s1302, 4
          %s1312 = int_to_ptr.vmem [resolvable:$true] %s1311
          %s1313 = sshll.u32 %s1309, 4
          %s1314 = int_to_ptr.hbm [resolvable:$true] %s1313
          %1316 = dma.vmem_to_hbm [thread:$0]  %s1312, 128, %s1314, %s1299
        $region76: #{tpu_custom_call.1} parent=43 // pred_fallthru
          _
      $region44: #{tpu_custom_call.1} parent=5 // pred_fallthru
        _
      %p1317 = scmp.le.s32.totalorder 2, %s24
      // Predicated region
      $region77: #{tpu_custom_call.1} parent=5 // pred_check
        %p1318 = pneg %p1317
      $region78: #{tpu_custom_call.1} parent=5 // pred_check_branch
        %1320 = sbr.rel (%p1318) target = $region80
      $region79: #{tpu_custom_call.1} parent=5 // pred_region
        %s1321 = ssub.s32 %s24, 2
        // Predicated region
        $region81: #{tpu_custom_call.1} parent=79 // pred_check
          %p1322 = pneg %p221
        $region82: #{tpu_custom_call.1} parent=79 // pred_check_branch
          %1324 = sbr.rel (%p1322) target = $region84
        $region83: #{tpu_custom_call.1} parent=79 // pred_region
          %s1325 = sand.u32 %s206, 1
          %s1326 = scalar_lea.sflag [#allocation7], %s1325
          %s1327 = sand.u32 %s206, 1
          %s1328 = smul.addr %s1327, 8
          %s1329 = scalar_lea.vmem [#allocation14], %s1328
          %1331 = dma.done %s1326, 128
        $region84: #{tpu_custom_call.1} parent=79 // pred_fallthru
          _
      $region80: #{tpu_custom_call.1} parent=5 // pred_fallthru
        _
    $region6: #{tpu_custom_call.1} parent=1 // loop_footer
      %s28 = sadd.s32 1, %s24
    $region7: #{tpu_custom_call.1} parent=1 // loop_footer_branch
      %23 = sbr.rel target = $region3
    $region8: #{tpu_custom_call.1} parent=1 // loop_exit
      _
    %1332 = vsyncpa [#allocation6], 1
    %s1333 = scalar_lea.sflag [#allocation6], 1
    %1334 = vsyncpa %s1333, 1
    %1335 = vsyncpa [#allocation9], 1
    %s1336 = scalar_lea.sflag [#allocation9], 1
    %1337 = vsyncpa %s1336, 1
    %1338 = vsyncpa [#allocation12], 1
    %s1339 = scalar_lea.sflag [#allocation12], 1
    %1340 = vsyncpa %s1339, 1
    %1341 = vsyncpa [#allocation7], 1
    %s1342 = scalar_lea.sflag [#allocation7], 1
    %1343 = vsyncpa %s1342, 1

</llo_original>
